<compile_context>
chip_gen: v6e
topology: v6e:2x2x1
jax: 0.10.0
libtpu: 0.0.40
codegen_flags: <defaults>
</compile_context>

<pallas_src>
import functools

import jax
import jax.numpy as jnp
from jax import lax
from jax.experimental import pallas as pl
from jax.experimental.pallas import tpu as pltpu

NEG_INF = -1e30
DEFAULT_VMEM_LIMIT = 48 * 1024 * 1024  # explicit scoped-VMEM limit (fits v7x)


def precompute_rope_params(head_dim, theta_base=10000, context_length=4096):
    assert head_dim % 2 == 0
    inv_freq = 1.0 / theta_base ** (
        jnp.arange(0, head_dim, 2)[: head_dim // 2].astype(jnp.float32) / head_dim
    )
    positions = jnp.arange(context_length).astype(jnp.float32)
    angles = positions[:, None] * inv_freq[None, :]
    angles = jnp.concatenate([angles, angles], axis=1)
    return jnp.cos(angles), jnp.sin(angles)


# ---------------------------------------------------------------------------
# Kernel 1: fused QKV projection + RoPE for a GROUP of Hc heads per step.
# grid = (batch, seq_tile, head_group)   (head_group innermost -> x DMA dedup)
# ---------------------------------------------------------------------------
def _qkv_rope_kernel(x_ref, w_ref, cos_ref, sin_ref, q_ref, k_ref, v_ref, *, hc, hd):
    x = x_ref[0]          # (ts, d_in)            bf16
    w = w_ref[...]        # (hc*3*hd, d_in)       bf16

    # x @ w.T without materializing a transpose (contract dim 1 with dim 1).
    qkv = lax.dot_general(
        x, w, (((1,), (1,)), ((), ())), preferred_element_type=jnp.float32
    )                     # (ts, hc*3*hd) f32

    cos = cos_ref[...]    # (ts, hd) f32
    sins = sin_ref[...]   # (ts, hd) f32 : sin pre-multiplied by rotate-half sign
    scale = 1.0 / (hd ** 0.5)  # softmax scale folded into q

    def rope(t):
        # rotate-half == roll by hd//2 (XLU slot); sign is baked into `sins`.
        return t * cos + pltpu.roll(t, hd // 2, 1) * sins

    for h in range(hc):   # static unroll over the head group
        base = 3 * hd * h
        q = qkv[:, base: base + hd]
        k = qkv[:, base + hd: base + 2 * hd]
        v = qkv[:, base + 2 * hd: base + 3 * hd]
        q_ref[0, h] = (rope(q) * scale).astype(q_ref.dtype)
        k_ref[0, h] = rope(k).astype(k_ref.dtype)
        v_ref[0, h] = v.astype(v_ref.dtype)


# ---------------------------------------------------------------------------
# Kernel 2: flash attention with online softmax.
# grid = (batch, head, q_tile, kv_tile) ; kv innermost ("arbitrary").
# K/V index_maps are clamped (see mha_forward) so skipped kv tiles are not
# DMA'd; the pl.when guard below must stay so stale blocks are never used.
# ---------------------------------------------------------------------------
def _flash_attn_kernel(q_ref, k_ref, v_ref, o_ref, m_ref, l_ref, acc_ref, *, tq, tk):
    qi = pl.program_id(2)
    ki = pl.program_id(3)
    nk = pl.num_programs(3)

    @pl.when(ki == 0)
    def _():
        m_ref[...] = jnp.full_like(m_ref, NEG_INF)
        l_ref[...] = jnp.zeros_like(l_ref)
        acc_ref[...] = jnp.zeros_like(acc_ref)

    q_start = qi * tq
    kv_start = ki * tk

    # Skip kv tiles entirely above the causal diagonal (their DMA is also
    # deduped away by the clamped index_map).
    @pl.when(kv_start < q_start + tq)
    def _():
        q = q_ref[0, 0]   # (tq, hd) bf16, pre-scaled by 1/sqrt(hd)
        k = k_ref[0, 0]   # (tk, hd) bf16
        v = v_ref[0, 0]   # (tk, hd) bf16

        # q @ k.T without a transpose (contract dim 1 with dim 1).
        s = lax.dot_general(
            q, k, (((1,), (1,)), ((), ())), preferred_element_type=jnp.float32
        )                 # (tq, tk) f32

        row = q_start + lax.broadcasted_iota(jnp.int32, (tq, tk), 0)
        col = kv_start + lax.broadcasted_iota(jnp.int32, (tq, tk), 1)
        s = jnp.where(col > row, NEG_INF, s)

        m_prev = m_ref[...]
        m_new = jnp.maximum(m_prev, jnp.max(s, axis=-1, keepdims=True))
        alpha = jnp.exp(m_prev - m_new)
        p = jnp.exp(s - m_new)

        l_ref[...] = alpha * l_ref[...] + jnp.sum(p, axis=-1, keepdims=True)
        acc_ref[...] = alpha * acc_ref[...] + jnp.dot(
            p.astype(v.dtype), v, preferred_element_type=jnp.float32
        )
        m_ref[...] = m_new

    @pl.when(ki == nk - 1)
    def _():
        inv_l = pl.reciprocal(l_ref[...], approx=True)  # EUP slot
        o_ref[0] = (acc_ref[...] * inv_l).astype(o_ref.dtype)


# ---------------------------------------------------------------------------
# Kernel 3: output projection, N-tiled (K = d_out stays wide for the MXU).
# grid = (batch, row_tile, n_tile)   (n_tile innermost -> ctx DMA dedup)
# ---------------------------------------------------------------------------
def _out_proj_kernel(ctx_ref, wo_ref, o_ref):
    ctx = ctx_ref[0]      # (tr, d_out) bf16
    wo = wo_ref[...]      # (tn, d_out) bf16
    o_ref[0] = lax.dot_general(
        ctx, wo, (((1,), (1,)), ((), ())), preferred_element_type=jnp.float32
    ).astype(o_ref.dtype)


def _largest_divisor_leq(n, cap):
    cap = max(1, min(n, cap))
    for d in range(cap, 0, -1):
        if n % d == 0:
            return d
    return 1


def mha_forward(x, wq, wk, wv, wo, cos, sin, num_heads, *,
                seq_tile=None, q_tile=None, kv_tile=None,
                out_tile=None, out_n_tile=None, head_group=None,
                vmem_limit_bytes=DEFAULT_VMEM_LIMIT):
    b, T, d_in = x.shape
    d_out = wq.shape[0]
    H = num_heads
    hd = d_out // H
    assert d_out % H == 0 and hd % 2 == 0

    def _pick(t, cap, total, name):
        t = min(cap, total) if t is None else t
        assert total % t == 0, f"{name} tile {t} must divide {total}"
        return t

    # Raised flash-tile defaults (clamped to T); per-step grid overhead is
    # ~0.35us so bigger tiles matter at long T.  The default VMEM limit is
    # explicit (48 MiB) so these tiles fit the scoped budget on all chips.
    ts = _pick(seq_tile, 256, T, "seq")
    tq = _pick(q_tile, 512, T, "q")
    tk = _pick(kv_tile, 1024, T, "kv")
    tr = _pick(out_tile, 256, T, "out_row")
    tn = _pick(out_n_tile, 512, d_out, "out_n")

    # Head group size: largest divisor of H whose bf16 weight block
    # (Hc*3*hd*d_in) stays <= ~8 MiB (x2 for double buffering on v7x).
    if head_group is None:
        cap = max(1, (8 << 20) // max(1, 3 * hd * d_in * 2))
        hc = _largest_divisor_leq(H, cap)
    else:
        hc = head_group
        assert H % hc == 0
    n_groups = H // hc

    bf16 = jnp.bfloat16
    x_b = x.astype(bf16)

    # Fused per-head QKV weights, flattened to (H*3*hd, d_in):
    # rows for head h are [Wq_h; Wk_h; Wv_h].
    wq_h = wq.reshape(H, hd, d_in)
    wk_h = wk.reshape(H, hd, d_in)
    wv_h = wv.reshape(H, hd, d_in)
    w_fused = (jnp.concatenate([wq_h, wk_h, wv_h], axis=1)
               .reshape(H * 3 * hd, d_in).astype(bf16))

    cos_t = cos[:T].astype(jnp.float32)                         # (T, hd)
    sign = jnp.concatenate(
        [-jnp.ones((hd // 2,), jnp.float32), jnp.ones((hd // 2,), jnp.float32)]
    )
    sin_signed = (sin[:T].astype(jnp.float32) * sign[None, :])  # (T, hd)

    cparams = functools.partial(
        pltpu.CompilerParams, vmem_limit_bytes=vmem_limit_bytes
    )

    # ---- 1) head-grouped fused QKV + RoPE -----------------------------------
    # head-group axis innermost & "arbitrary" so the x block index stays
    # constant across it -> Pallas dedups the x DMA (x read once per seq tile).
    qkv_shape = jax.ShapeDtypeStruct((b, H, T, hd), bf16)
    q, k, v = pl.pallas_call(
        functools.partial(_qkv_rope_kernel, hc=hc, hd=hd),
        out_shape=(qkv_shape, qkv_shape, qkv_shape),
        grid=(b, T // ts, n_groups),
        in_specs=[
            pl.BlockSpec((1, ts, d_in), lambda bi, si, gi: (bi, si, 0)),
            pl.BlockSpec((hc * 3 * hd, d_in), lambda bi, si, gi: (gi, 0)),
            pl.BlockSpec((ts, hd), lambda bi, si, gi: (si, 0)),
            pl.BlockSpec((ts, hd), lambda bi, si, gi: (si, 0)),
        ],
        out_specs=(
            pl.BlockSpec((1, hc, ts, hd), lambda bi, si, gi: (bi, gi, si, 0)),
            pl.BlockSpec((1, hc, ts, hd), lambda bi, si, gi: (bi, gi, si, 0)),
            pl.BlockSpec((1, hc, ts, hd), lambda bi, si, gi: (bi, gi, si, 0)),
        ),
        compiler_params=cparams(
            dimension_semantics=("parallel", "parallel", "arbitrary")),
    )(x_b, w_fused, cos_t, sin_signed)

    # ---- 2) flash attention --------------------------------------------------
    # K/V index_maps clamp the kv block index to the last tile needed by this
    # q tile -> no DMA is issued for causally-skipped tiles (block index is
    # constant over them, so Pallas dedups the copy).
    def kv_map(bi, hi, qi, ki):
        last_needed = (qi * tq + tq - 1) // tk
        return (bi, hi, jnp.minimum(ki, last_needed), 0)

    ctx = pl.pallas_call(
        functools.partial(_flash_attn_kernel, tq=tq, tk=tk),
        out_shape=jax.ShapeDtypeStruct((b, T, d_out), bf16),
        grid=(b, H, T // tq, T // tk),
        in_specs=[
            pl.BlockSpec((1, 1, tq, hd), lambda bi, hi, qi, ki: (bi, hi, qi, 0)),
            pl.BlockSpec((1, 1, tk, hd), kv_map),
            pl.BlockSpec((1, 1, tk, hd), kv_map),
        ],
        # Output written head-concatenated (b, T, d_out) so the out-proj is one
        # wide matmul.  hd=128 keeps the store lane-dense; for hd=64 configs
        # widen this block to 2 heads.
        # TODO(synk): widen out block to (1, tq, 2*hd) if hd < 128 is ever used.
        out_specs=pl.BlockSpec((1, tq, hd), lambda bi, hi, qi, ki: (bi, qi, hi)),
        scratch_shapes=[
            pltpu.VMEM((tq, 1), jnp.float32),   # running max m
            pltpu.VMEM((tq, 1), jnp.float32),   # running denom l
            pltpu.VMEM((tq, hd), jnp.float32),  # f32 accumulator
        ],
        compiler_params=cparams(
            dimension_semantics=("parallel", "parallel", "parallel", "arbitrary")),
    )(q, k, v)

    # ---- 3) output projection (N-tiled weight) -------------------------------
    out = pl.pallas_call(
        _out_proj_kernel,
        out_shape=jax.ShapeDtypeStruct((b, T, d_out), jnp.float32),
        grid=(b, T // tr, d_out // tn),
        in_specs=[
            pl.BlockSpec((1, tr, d_out), lambda bi, ri, ni: (bi, ri, 0)),
            pl.BlockSpec((tn, d_out), lambda bi, ri, ni: (ni, 0)),
        ],
        out_specs=pl.BlockSpec((1, tr, tn), lambda bi, ri, ni: (bi, ri, ni)),
        compiler_params=cparams(
            dimension_semantics=("parallel", "parallel", "arbitrary")),
    )(ctx, wo.astype(bf16))
    return out


def mha_reference(x, wq, wk, wv, wo, cos, sin, num_heads):
    b, T, d_in = x.shape
    d_out = wq.shape[0]
    hd = d_out // num_heads

    def split(t):
        return t.reshape(b, T, num_heads, hd).transpose(0, 2, 1, 3)

    q = split(x @ wq.T)
    k = split(x @ wk.T)
    v = split(x @ wv.T)

    def rope(t):
        t1 = t[..., : hd // 2]
        t2 = t[..., hd // 2:]
        rot = jnp.concatenate([-t2, t1], axis=-1)
        return t * cos[:T][None, None] + rot * sin[:T][None, None]

    q = rope(q)
    k = rope(k)
    s = jnp.einsum("bhqd,bhkd->bhqk", q, k)
    mask = jnp.triu(jnp.ones((T, T), dtype=bool), 1)
    s = jnp.where(mask[None, None], -jnp.inf, s)
    w = jax.nn.softmax(s / hd ** 0.5, axis=-1)
    ctx = jnp.einsum("bhqk,bhkd->bhqd", w, v).transpose(0, 2, 1, 3).reshape(b, T, d_out)
    return ctx @ wo.T


if __name__ == "__main__":
    # Small but TPU-tile-aligned shapes: head_dim = 128 (one lane tile),
    # T = 128 with 64-wide q/kv tiles so the flash loop, causal DMA clamp /
    # tile skipping, head-grouped QKV and the N-tiled out-proj are exercised.
    b, T, d_in, d_out, num_heads = 2, 128, 128, 256, 2
    context_length = 256
    head_dim = d_out // num_heads

    key = jax.random.PRNGKey(0)
    kx, kq, kk, kv, ko = jax.random.split(key, 5)
    x = jax.random.normal(kx, (b, T, d_in), dtype=jnp.float32)
    wq = jax.random.normal(kq, (d_out, d_in), dtype=jnp.float32) * 0.05
    wk = jax.random.normal(kk, (d_out, d_in), dtype=jnp.float32) * 0.05
    wv = jax.random.normal(kv, (d_out, d_in), dtype=jnp.float32) * 0.05
    wo = jax.random.normal(ko, (d_out, d_out), dtype=jnp.float32) * 0.05

    cos, sin = precompute_rope_params(head_dim, context_length=context_length)

    out = mha_forward(x, wq, wk, wv, wo, cos, sin, num_heads,
                      seq_tile=64, q_tile=64, kv_tile=64,
                      out_tile=128, out_n_tile=128)
    out = jax.block_until_ready(out)

    ref = mha_reference(x, wq, wk, wv, wo, cos, sin, num_heads)
    assert out.shape == (b, T, d_out)
    # bf16 MXU operands (f32 accumulation) -> compare at bf16-level tolerance.
    assert jnp.allclose(out, ref, atol=3e-2, rtol=3e-2), "mismatch vs reference"

    print("KERNEL_OK")
</pallas_src>

<mosaic_0001>
module attributes {stable_mosaic.version = 11 : i64} {
  func.func @_qkv_rope_kernel(%arg0: i32, %arg1: i32, %arg2: i32, %arg3: memref<1x64x128xbf16, #tpu.memory_space<vmem>>, %arg4: memref<768x128xbf16, #tpu.memory_space<vmem>>, %arg5: memref<64x128xf32, #tpu.memory_space<vmem>>, %arg6: memref<64x128xf32, #tpu.memory_space<vmem>>, %arg7: memref<1x2x64x128xbf16, #tpu.memory_space<vmem>>, %arg8: memref<1x2x64x128xbf16, #tpu.memory_space<vmem>>, %arg9: memref<1x2x64x128xbf16, #tpu.memory_space<vmem>>) attributes {dimension_semantics = [#tpu.dimension_semantics<parallel>, #tpu.dimension_semantics<parallel>, #tpu.dimension_semantics<arbitrary>], iteration_bounds = array<i64: 2, 2, 1>, scalar_prefetch = 0 : i64, scratch_operands = 0 : i64, tpu.core_type = #tpu.core_type<tc>, window_params = [{transform_indices = @transform_0, window_bounds = array<i64: 1, 64, 128>}, {transform_indices = @transform_1, window_bounds = array<i64: 768, 128>}, {transform_indices = @transform_2, window_bounds = array<i64: 64, 128>}, {transform_indices = @transform_3, window_bounds = array<i64: 64, 128>}, {transform_indices = @transform_4, window_bounds = array<i64: 1, 2, 64, 128>}, {transform_indices = @transform_5, window_bounds = array<i64: 1, 2, 64, 128>}, {transform_indices = @transform_6, window_bounds = array<i64: 1, 2, 64, 128>}]} {
    %c0 = arith.constant 0 : index
    %c0_0 = arith.constant 0 : index
    %c0_1 = arith.constant 0 : index
    %0 = vector.load %arg3[%c0, %c0_0, %c0_1] : memref<1x64x128xbf16, #tpu.memory_space<vmem>>, vector<1x64x128xbf16>
    %1 = vector.shape_cast %0 : vector<1x64x128xbf16> to vector<64x128xbf16>
    %c0_2 = arith.constant 0 : index
    %c0_3 = arith.constant 0 : index
    %2 = vector.load %arg4[%c0_2, %c0_3] : memref<768x128xbf16, #tpu.memory_space<vmem>>, vector<768x128xbf16>
    %cst = arith.constant dense<0.000000e+00> : vector<64x768xf32>
    %3 = tpu.matmul %1, %2, %cst {dimension_numbers = #tpu.dot_dimension_numbers<[1], [1], [0], [0], [0, 0, 1, 0], [], []>} : vector<64x128xbf16>, vector<768x128xbf16>, vector<64x768xf32> -> vector<64x768xf32>
    %c0_4 = arith.constant 0 : index
    %c0_5 = arith.constant 0 : index
    %4 = vector.load %arg5[%c0_4, %c0_5] : memref<64x128xf32, #tpu.memory_space<vmem>>, vector<64x128xf32>
    %c0_6 = arith.constant 0 : index
    %c0_7 = arith.constant 0 : index
    %5 = vector.load %arg6[%c0_6, %c0_7] : memref<64x128xf32, #tpu.memory_space<vmem>>, vector<64x128xf32>
    %6 = vector.extract_strided_slice %3 {offsets = [0, 0], sizes = [64, 128], strides = [1, 1]} : vector<64x768xf32> to vector<64x128xf32>
    %7 = vector.extract_strided_slice %3 {offsets = [0, 128], sizes = [64, 128], strides = [1, 1]} : vector<64x768xf32> to vector<64x128xf32>
    %8 = vector.extract_strided_slice %3 {offsets = [0, 256], sizes = [64, 128], strides = [1, 1]} : vector<64x768xf32> to vector<64x128xf32>
    %9 = arith.mulf %6, %4 : vector<64x128xf32>
    %c64_i32 = arith.constant 64 : i32
    %10 = tpu.dynamic_rotate %6 by %c64_i32 dim 1 : vector<64x128xf32>, i32 -> vector<64x128xf32>
    %11 = arith.mulf %10, %5 : vector<64x128xf32>
    %12 = arith.addf %9, %11 : vector<64x128xf32>
    %cst_8 = arith.constant 0.0883883461 : f32
    %13 = vector.broadcast %cst_8 : f32 to vector<64x128xf32>
    %14 = arith.mulf %12, %13 : vector<64x128xf32>
    %15 = arith.truncf %14 : vector<64x128xf32> to vector<64x128xbf16>
    %c0_9 = arith.constant 0 : index
    %c0_10 = arith.constant 0 : index
    %c0_11 = arith.constant 0 : index
    %c0_12 = arith.constant 0 : index
    %16 = vector.load %arg7[%c0_9, %c0_10, %c0_11, %c0_12] : memref<1x2x64x128xbf16, #tpu.memory_space<vmem>>, vector<1x1x64x128xbf16>
    %17 = vector.shape_cast %16 : vector<1x1x64x128xbf16> to vector<64x128xbf16>
    %18 = vector.shape_cast %15 : vector<64x128xbf16> to vector<1x1x64x128xbf16>
    tpu.vector_store %arg7[%c0_9, %c0_10, %c0_11, %c0_12], %18 {strides = array<i32>} : memref<1x2x64x128xbf16, #tpu.memory_space<vmem>>, vector<1x1x64x128xbf16>,
    %19 = arith.mulf %7, %4 : vector<64x128xf32>
    %c64_i32_13 = arith.constant 64 : i32
    %20 = tpu.dynamic_rotate %7 by %c64_i32_13 dim 1 : vector<64x128xf32>, i32 -> vector<64x128xf32>
    %21 = arith.mulf %20, %5 : vector<64x128xf32>
    %22 = arith.addf %19, %21 : vector<64x128xf32>
    %23 = arith.truncf %22 : vector<64x128xf32> to vector<64x128xbf16>
    %c0_14 = arith.constant 0 : index
    %c0_15 = arith.constant 0 : index
    %c0_16 = arith.constant 0 : index
    %c0_17 = arith.constant 0 : index
    %24 = vector.load %arg8[%c0_14, %c0_15, %c0_16, %c0_17] : memref<1x2x64x128xbf16, #tpu.memory_space<vmem>>, vector<1x1x64x128xbf16>
    %25 = vector.shape_cast %24 : vector<1x1x64x128xbf16> to vector<64x128xbf16>
    %26 = vector.shape_cast %23 : vector<64x128xbf16> to vector<1x1x64x128xbf16>
    tpu.vector_store %arg8[%c0_14, %c0_15, %c0_16, %c0_17], %26 {strides = array<i32>} : memref<1x2x64x128xbf16, #tpu.memory_space<vmem>>, vector<1x1x64x128xbf16>,
    %27 = arith.truncf %8 : vector<64x128xf32> to vector<64x128xbf16>
    %c0_18 = arith.constant 0 : index
    %c0_19 = arith.constant 0 : index
    %c0_20 = arith.constant 0 : index
    %c0_21 = arith.constant 0 : index
    %28 = vector.load %arg9[%c0_18, %c0_19, %c0_20, %c0_21] : memref<1x2x64x128xbf16, #tpu.memory_space<vmem>>, vector<1x1x64x128xbf16>
    %29 = vector.shape_cast %28 : vector<1x1x64x128xbf16> to vector<64x128xbf16>
    %30 = vector.shape_cast %27 : vector<64x128xbf16> to vector<1x1x64x128xbf16>
    tpu.vector_store %arg9[%c0_18, %c0_19, %c0_20, %c0_21], %30 {strides = array<i32>} : memref<1x2x64x128xbf16, #tpu.memory_space<vmem>>, vector<1x1x64x128xbf16>,
    %31 = vector.extract_strided_slice %3 {offsets = [0, 384], sizes = [64, 128], strides = [1, 1]} : vector<64x768xf32> to vector<64x128xf32>
    %32 = vector.extract_strided_slice %3 {offsets = [0, 512], sizes = [64, 128], strides = [1, 1]} : vector<64x768xf32> to vector<64x128xf32>
    %33 = vector.extract_strided_slice %3 {offsets = [0, 640], sizes = [64, 128], strides = [1, 1]} : vector<64x768xf32> to vector<64x128xf32>
    %34 = arith.mulf %31, %4 : vector<64x128xf32>
    %c64_i32_22 = arith.constant 64 : i32
    %35 = tpu.dynamic_rotate %31 by %c64_i32_22 dim 1 : vector<64x128xf32>, i32 -> vector<64x128xf32>
    %36 = arith.mulf %35, %5 : vector<64x128xf32>
    %37 = arith.addf %34, %36 : vector<64x128xf32>
    %cst_23 = arith.constant 0.0883883461 : f32
    %38 = vector.broadcast %cst_23 : f32 to vector<64x128xf32>
    %39 = arith.mulf %37, %38 : vector<64x128xf32>
    %40 = arith.truncf %39 : vector<64x128xf32> to vector<64x128xbf16>
    %c0_24 = arith.constant 0 : index
    %c1 = arith.constant 1 : index
    %c0_25 = arith.constant 0 : index
    %c0_26 = arith.constant 0 : index
    %41 = vector.load %arg7[%c0_24, %c1, %c0_25, %c0_26] : memref<1x2x64x128xbf16, #tpu.memory_space<vmem>>, vector<1x1x64x128xbf16>
    %42 = vector.shape_cast %41 : vector<1x1x64x128xbf16> to vector<64x128xbf16>
    %43 = vector.shape_cast %40 : vector<64x128xbf16> to vector<1x1x64x128xbf16>
    tpu.vector_store %arg7[%c0_24, %c1, %c0_25, %c0_26], %43 {strides = array<i32>} : memref<1x2x64x128xbf16, #tpu.memory_space<vmem>>, vector<1x1x64x128xbf16>,
    %44 = arith.mulf %32, %4 : vector<64x128xf32>
    %c64_i32_27 = arith.constant 64 : i32
    %45 = tpu.dynamic_rotate %32 by %c64_i32_27 dim 1 : vector<64x128xf32>, i32 -> vector<64x128xf32>
    %46 = arith.mulf %45, %5 : vector<64x128xf32>
    %47 = arith.addf %44, %46 : vector<64x128xf32>
    %48 = arith.truncf %47 : vector<64x128xf32> to vector<64x128xbf16>
    %c0_28 = arith.constant 0 : index
    %c1_29 = arith.constant 1 : index
    %c0_30 = arith.constant 0 : index
    %c0_31 = arith.constant 0 : index
    %49 = vector.load %arg8[%c0_28, %c1_29, %c0_30, %c0_31] : memref<1x2x64x128xbf16, #tpu.memory_space<vmem>>, vector<1x1x64x128xbf16>
    %50 = vector.shape_cast %49 : vector<1x1x64x128xbf16> to vector<64x128xbf16>
    %51 = vector.shape_cast %48 : vector<64x128xbf16> to vector<1x1x64x128xbf16>
    tpu.vector_store %arg8[%c0_28, %c1_29, %c0_30, %c0_31], %51 {strides = array<i32>} : memref<1x2x64x128xbf16, #tpu.memory_space<vmem>>, vector<1x1x64x128xbf16>,
    %52 = arith.truncf %33 : vector<64x128xf32> to vector<64x128xbf16>
    %c0_32 = arith.constant 0 : index
    %c1_33 = arith.constant 1 : index
    %c0_34 = arith.constant 0 : index
    %c0_35 = arith.constant 0 : index
    %53 = vector.load %arg9[%c0_32, %c1_33, %c0_34, %c0_35] : memref<1x2x64x128xbf16, #tpu.memory_space<vmem>>, vector<1x1x64x128xbf16>
    %54 = vector.shape_cast %53 : vector<1x1x64x128xbf16> to vector<64x128xbf16>
    %55 = vector.shape_cast %52 : vector<64x128xbf16> to vector<1x1x64x128xbf16>
    tpu.vector_store %arg9[%c0_32, %c1_33, %c0_34, %c0_35], %55 {strides = array<i32>} : memref<1x2x64x128xbf16, #tpu.memory_space<vmem>>, vector<1x1x64x128xbf16>,
    return
  }
  func.func @transform_0(%arg0: i32, %arg1: i32, %arg2: i32) -> (i32, i32, i32) {
    %c0_i32 = arith.constant 0 : i32
    %c0_i32_0 = arith.constant 0 : i32
    return %arg0, %arg1, %c0_i32 : i32, i32, i32
  }
  func.func @transform_1(%arg0: i32, %arg1: i32, %arg2: i32) -> (i32, i32) {
    %c0_i32 = arith.constant 0 : i32
    %c0_i32_0 = arith.constant 0 : i32
    return %arg2, %c0_i32 : i32, i32
  }
  func.func @transform_2(%arg0: i32, %arg1: i32, %arg2: i32) -> (i32, i32) {
    %c0_i32 = arith.constant 0 : i32
    %c0_i32_0 = arith.constant 0 : i32
    return %arg1, %c0_i32 : i32, i32
  }
  func.func @transform_3(%arg0: i32, %arg1: i32, %arg2: i32) -> (i32, i32) {
    %c0_i32 = arith.constant 0 : i32
    %c0_i32_0 = arith.constant 0 : i32
    return %arg1, %c0_i32 : i32, i32
  }
  func.func @transform_4(%arg0: i32, %arg1: i32, %arg2: i32) -> (i32, i32, i32, i32) {
    %c0_i32 = arith.constant 0 : i32
    %c0_i32_0 = arith.constant 0 : i32
    return %arg0, %arg2, %arg1, %c0_i32 : i32, i32, i32, i32
  }
  func.func @transform_5(%arg0: i32, %arg1: i32, %arg2: i32) -> (i32, i32, i32, i32) {
    %c0_i32 = arith.constant 0 : i32
    %c0_i32_0 = arith.constant 0 : i32
    return %arg0, %arg2, %arg1, %c0_i32 : i32, i32, i32, i32
  }
  func.func @transform_6(%arg0: i32, %arg1: i32, %arg2: i32) -> (i32, i32, i32, i32) {
    %c0_i32 = arith.constant 0 : i32
    %c0_i32_0 = arith.constant 0 : i32
    return %arg0, %arg2, %arg1, %c0_i32 : i32, i32, i32, i32
  }
}

</mosaic_0001>

<llo_original>
// kernel: tpu_custom_call.1
$region0: #{tpu_custom_call.1}
  #allocation0 [shape = 'u32[]', space=smem, size = 0x4, offset = 0x4, fixed_abs, tag = 'smem constant byte address 0x4 - core index']
  #allocation1 [shape = 'u32[144,128]{1,0:T(1,128)}', space=vmem, size = 0x12000, scoped, tag = 'internal scratch']
  #allocation13 [shape = 's32[]', space=sflag, size = 0x4, offset = 0, fixed_abs, tag = 'sflag constant byte address 0x0 - dummy sync flag']
  #allocation15 [shape = 's32[]', space=sflag, size = 0x4, offset = 0, fixed_abs, tag = 'sflag constant byte address 0x0 - dummy sync flag']
  #allocation17 [shape = 's32[]', space=sflag, size = 0x4, offset = 0, fixed_abs, tag = 'sflag constant byte address 0x0 - dummy sync flag']
  %s0 = inlined_call_operand.hbm [shape: bf16[2,128,128], index: 0, kind: input, shape index: {}]
  %s1 = inlined_call_operand.hbm [shape: bf16[768,128], index: 1, kind: input, shape index: {}]
  %s2 = inlined_call_operand.hbm [shape: f32[128,128], index: 2, kind: input, shape index: {}]
  %s3 = inlined_call_operand.hbm [shape: f32[128,128], index: 3, kind: input, shape index: {}]
  %s4 = inlined_call_operand.hbm [shape: bf16[2,2,128,128], index: 4, kind: output, shape index: {0}]
  %s5 = inlined_call_operand.hbm [shape: bf16[2,2,128,128], index: 5, kind: output, shape index: {1}]
  %s6 = inlined_call_operand.hbm [shape: bf16[2,2,128,128], index: 6, kind: output, shape index: {2}]
  %7 = xla_tuple %s4, %s5, %s6
  %s8 = sld [smem:[#allocation0]]
  $region81: #{tpu_custom_call.1} parent=0
    _
  %s10 = ssub.s32 1, %s8
  %s11 = scalar_select 0, %s10, %s8
  $region1: #{tpu_custom_call.1} parent=0
    #allocation2 [shape = 'u8[32768]{0}', space=vmem, size = 0x8000, scoped, tag = 'input window, operand 0']
    #allocation3 [shape = 's32[2]{0}', space=sflag, size = 0x8, scoped, tag = 'scoped memory for tpu_custom_call.1']
    #allocation4 [shape = 's32[2]{0}', space=sflag, size = 0x8, scoped, tag = 'scoped memory for tpu_custom_call.1']
    #allocation5 [shape = 'u8[196608]{0}', space=vmem, size = 0x30000, scoped, tag = 'input window, operand 1, single buffered']
    #allocation6 [shape = 's32[1]{0}', space=sflag, size = 0x4, scoped, tag = 'scoped memory for tpu_custom_call.1']
    #allocation7 [shape = 'u8[65536]{0}', space=vmem, size = 0x10000, scoped, tag = 'input window, operand 2']
    #allocation8 [shape = 'u8[65536]{0}', space=vmem, size = 0x10000, scoped, tag = 'input window, operand 3']
    #allocation9 [shape = 'u8[65536]{0}', space=vmem, size = 0x10000, scoped, tag = 'output window, operand 0']
    #allocation10 [shape = 'u8[65536]{0}', space=vmem, size = 0x10000, scoped, tag = 'output window, operand 1']
    #allocation11 [shape = 's32[2]{0}', space=sflag, size = 0x8, scoped, tag = 'scoped memory for tpu_custom_call.1']
    #allocation12 [shape = 'u8[65536]{0}', space=vmem, size = 0x10000, scoped, tag = 'output window, operand 2']
    %12 = vsyncpa [#allocation3], 0
    %s13 = scalar_lea.sflag [#allocation3], 1
    %14 = vsyncpa %s13, 0
    %15 = vsyncpa [#allocation6], 0
    %16 = vsyncpa [#allocation4], 0
    %s17 = scalar_lea.sflag [#allocation4], 1
    %18 = vsyncpa %s17, 0
    %19 = vsyncpa [#allocation11], 0
    %s20 = scalar_lea.sflag [#allocation11], 1
    %21 = vsyncpa %s20, 0
    loop: start=0, step=1, limit=6
    $region2: #{tpu_custom_call.1} parent=1 // loop_pre_header
      _
    $region3: #{tpu_custom_call.1} parent=1 // loop_header
      %s23 = sphi 0, %s27
      %p24 = scmp.ge.s32.totalorder %s23, 6
      %s30 = sphi 0, %s49
      %s31 = sphi 0, %s45
      %s32 = sphi 0, %s41
      %s33 = sphi 0, %s30
      %s34 = sphi 0, %s31
      %s35 = sphi 0, %s32
      %s36 = sphi 0, %s33
      %s37 = sphi 0, %s34
      %s38 = sphi 0, %s35
      %s54 = sphi 0, %s56
      %s57 = sphi 0, %s54
      %s58 = sphi 0, %s57
      %s74 = sphi 0, %s58
      %s80 = sphi 0, %s82
      %s83 = sphi 0, %s80
      %s84 = sphi 0, %s83
      %s100 = sphi 0, %s84
      %s106 = sphi 0, %s108
      %s109 = sphi 0, %s106
      %s110 = sphi 0, %s109
      %s126 = sphi 0, %s110
      %s132 = sphi 0, %s134
      %s135 = sphi 0, %s132
      %s136 = sphi 0, %s135
      %s152 = sphi 0, %s136
      %s162 = sphi 0, %s164
      %s165 = sphi 0, %s162
      %s166 = sphi 0, %s165
      %s182 = sphi 0, %s166
      %s192 = sphi 0, %s194
      %s195 = sphi 0, %s192
      %s196 = sphi 0, %s195
      %s212 = sphi 0, %s196
      %s222 = sphi 0, %s224
      %s225 = sphi 0, %s222
      %s226 = sphi 0, %s225
      %s242 = sphi 0, %s226
    $region4: #{tpu_custom_call.1} parent=1 // loop_header_branch
      %26 = sbr.rel (%p24) target = $region8
    $region5: #{tpu_custom_call.1} parent=1 // loop_body
      %s28 = ssub.s32 %s23, 1
      %s29 = ssub.s32 %s23, 2
      %s39 = sadd.s32 1, %s32
      %p40 = scmp.ge.s32.totalorder %s39, 1
      %s41 = scalar_select %p40, 0, %s39
      %s42 = sadd.s32 1, %s31
      %s43 = scalar_select %p40, %s42, %s31
      %p44 = scmp.ge.s32.totalorder %s43, 2
      %s45 = scalar_select %p44, 0, %s43
      %s46 = sadd.s32 1, %s30
      %s47 = scalar_select %p44, %s46, %s30
      %p48 = scmp.ge.s32.totalorder %s47, 2
      %s49 = scalar_select %p48, 0, %s47
      %s50 = ssub.s32 %s30, %s49
      %s51 = ssub.s32 %s31, %s45
      %s52 = sor.u32 %s50, %s51
      %p53 = scmp.eq.s32.totalorder %s52, 0
      %s55 = sadd.s32 %s54, 1
      %s56 = scalar_select %p53, %s54, %s55
      %p59 = pneg %p53
      %p60 = scmp.eq.s32.totalorder %s23, 3
      %p61 = por %p59, %p60
      %p62 = scmp.ne.s32.totalorder %s54, %s57
      %p63 = scmp.eq.s32.totalorder %s23, 0
      %p64 = por %p62, %p63
      %p65 = scmp.ne.s32.totalorder %s54, %s57
      %p66 = scmp.eq.s32.totalorder %s28, 3
      %p67 = por %p65, %p66
      %p68 = scmp.ne.s32.totalorder %s57, %s58
      %p69 = scmp.eq.s32.totalorder %s28, 0
      %p70 = por %p68, %p69
      %p71 = scmp.ne.s32.totalorder %s57, %s58
      %p72 = scmp.eq.s32.totalorder %s29, 3
      %p73 = por %p71, %p72
      %p75 = scmp.ne.s32.totalorder %s58, %s74
      %p76 = scmp.eq.s32.totalorder %s29, 0
      %p77 = por %p75, %p76
      %s78 = ssub.s32 %s32, %s41
      %p79 = scmp.eq.s32.totalorder %s78, 0
      %s81 = sadd.s32 %s80, 1
      %s82 = scalar_select %p79, %s80, %s81
      %p85 = pneg %p79
      %p86 = scmp.eq.s32.totalorder %s23, 3
      %p87 = por %p85, %p86
      %p88 = scmp.ne.s32.totalorder %s80, %s83
      %p89 = scmp.eq.s32.totalorder %s23, 0
      %p90 = por %p88, %p89
      %p91 = scmp.ne.s32.totalorder %s80, %s83
      %p92 = scmp.eq.s32.totalorder %s28, 3
      %p93 = por %p91, %p92
      %p94 = scmp.ne.s32.totalorder %s83, %s84
      %p95 = scmp.eq.s32.totalorder %s28, 0
      %p96 = por %p94, %p95
      %p97 = scmp.ne.s32.totalorder %s83, %s84
      %p98 = scmp.eq.s32.totalorder %s29, 3
      %p99 = por %p97, %p98
      %p101 = scmp.ne.s32.totalorder %s84, %s100
      %p102 = scmp.eq.s32.totalorder %s29, 0
      %p103 = por %p101, %p102
      %s104 = ssub.s32 %s31, %s45
      %p105 = scmp.eq.s32.totalorder %s104, 0
      %s107 = sadd.s32 %s106, 1
      %s108 = scalar_select %p105, %s106, %s107
      %p111 = pneg %p105
      %p112 = scmp.eq.s32.totalorder %s23, 3
      %p113 = por %p111, %p112
      %p114 = scmp.ne.s32.totalorder %s106, %s109
      %p115 = scmp.eq.s32.totalorder %s23, 0
      %p116 = por %p114, %p115
      %p117 = scmp.ne.s32.totalorder %s106, %s109
      %p118 = scmp.eq.s32.totalorder %s28, 3
      %p119 = por %p117, %p118
      %p120 = scmp.ne.s32.totalorder %s109, %s110
      %p121 = scmp.eq.s32.totalorder %s28, 0
      %p122 = por %p120, %p121
      %p123 = scmp.ne.s32.totalorder %s109, %s110
      %p124 = scmp.eq.s32.totalorder %s29, 3
      %p125 = por %p123, %p124
      %p127 = scmp.ne.s32.totalorder %s110, %s126
      %p128 = scmp.eq.s32.totalorder %s29, 0
      %p129 = por %p127, %p128
      %s130 = ssub.s32 %s31, %s45
      %p131 = scmp.eq.s32.totalorder %s130, 0
      %s133 = sadd.s32 %s132, 1
      %s134 = scalar_select %p131, %s132, %s133
      %p137 = pneg %p131
      %p138 = scmp.eq.s32.totalorder %s23, 3
      %p139 = por %p137, %p138
      %p140 = scmp.ne.s32.totalorder %s132, %s135
      %p141 = scmp.eq.s32.totalorder %s23, 0
      %p142 = por %p140, %p141
      %p143 = scmp.ne.s32.totalorder %s132, %s135
      %p144 = scmp.eq.s32.totalorder %s28, 3
      %p145 = por %p143, %p144
      %p146 = scmp.ne.s32.totalorder %s135, %s136
      %p147 = scmp.eq.s32.totalorder %s28, 0
      %p148 = por %p146, %p147
      %p149 = scmp.ne.s32.totalorder %s135, %s136
      %p150 = scmp.eq.s32.totalorder %s29, 3
      %p151 = por %p149, %p150
      %p153 = scmp.ne.s32.totalorder %s136, %s152
      %p154 = scmp.eq.s32.totalorder %s29, 0
      %p155 = por %p153, %p154
      %s156 = ssub.s32 %s30, %s49
      %s157 = ssub.s32 %s32, %s41
      %s158 = sor.u32 %s156, %s157
      %s159 = ssub.s32 %s31, %s45
      %s160 = sor.u32 %s158, %s159
      %p161 = scmp.eq.s32.totalorder %s160, 0
      %s163 = sadd.s32 %s162, 1
      %s164 = scalar_select %p161, %s162, %s163
      %p167 = pneg %p161
      %p168 = scmp.eq.s32.totalorder %s23, 3
      %p169 = por %p167, %p168
      %p170 = scmp.ne.s32.totalorder %s162, %s165
      %p171 = scmp.eq.s32.totalorder %s23, 0
      %p172 = por %p170, %p171
      %p173 = scmp.ne.s32.totalorder %s162, %s165
      %p174 = scmp.eq.s32.totalorder %s28, 3
      %p175 = por %p173, %p174
      %p176 = scmp.ne.s32.totalorder %s165, %s166
      %p177 = scmp.eq.s32.totalorder %s28, 0
      %p178 = por %p176, %p177
      %p179 = scmp.ne.s32.totalorder %s165, %s166
      %p180 = scmp.eq.s32.totalorder %s29, 3
      %p181 = por %p179, %p180
      %p183 = scmp.ne.s32.totalorder %s166, %s182
      %p184 = scmp.eq.s32.totalorder %s29, 0
      %p185 = por %p183, %p184
      %s186 = ssub.s32 %s30, %s49
      %s187 = ssub.s32 %s32, %s41
      %s188 = sor.u32 %s186, %s187
      %s189 = ssub.s32 %s31, %s45
      %s190 = sor.u32 %s188, %s189
      %p191 = scmp.eq.s32.totalorder %s190, 0
      %s193 = sadd.s32 %s192, 1
      %s194 = scalar_select %p191, %s192, %s193
      %p197 = pneg %p191
      %p198 = scmp.eq.s32.totalorder %s23, 3
      %p199 = por %p197, %p198
      %p200 = scmp.ne.s32.totalorder %s192, %s195
      %p201 = scmp.eq.s32.totalorder %s23, 0
      %p202 = por %p200, %p201
      %p203 = scmp.ne.s32.totalorder %s192, %s195
      %p204 = scmp.eq.s32.totalorder %s28, 3
      %p205 = por %p203, %p204
      %p206 = scmp.ne.s32.totalorder %s195, %s196
      %p207 = scmp.eq.s32.totalorder %s28, 0
      %p208 = por %p206, %p207
      %p209 = scmp.ne.s32.totalorder %s195, %s196
      %p210 = scmp.eq.s32.totalorder %s29, 3
      %p211 = por %p209, %p210
      %p213 = scmp.ne.s32.totalorder %s196, %s212
      %p214 = scmp.eq.s32.totalorder %s29, 0
      %p215 = por %p213, %p214
      %s216 = ssub.s32 %s30, %s49
      %s217 = ssub.s32 %s32, %s41
      %s218 = sor.u32 %s216, %s217
      %s219 = ssub.s32 %s31, %s45
      %s220 = sor.u32 %s218, %s219
      %p221 = scmp.eq.s32.totalorder %s220, 0
      %s223 = sadd.s32 %s222, 1
      %s224 = scalar_select %p221, %s222, %s223
      %p227 = pneg %p221
      %p228 = scmp.eq.s32.totalorder %s23, 3
      %p229 = por %p227, %p228
      %p230 = scmp.ne.s32.totalorder %s222, %s225
      %p231 = scmp.eq.s32.totalorder %s23, 0
      %p232 = por %p230, %p231
      %p233 = scmp.ne.s32.totalorder %s222, %s225
      %p234 = scmp.eq.s32.totalorder %s28, 3
      %p235 = por %p233, %p234
      %p236 = scmp.ne.s32.totalorder %s225, %s226
      %p237 = scmp.eq.s32.totalorder %s28, 0
      %p238 = por %p236, %p237
      %p239 = scmp.ne.s32.totalorder %s225, %s226
      %p240 = scmp.eq.s32.totalorder %s29, 3
      %p241 = por %p239, %p240
      %p243 = scmp.ne.s32.totalorder %s226, %s242
      %p244 = scmp.eq.s32.totalorder %s29, 0
      %p245 = por %p243, %p244
      %p246 = scmp.le.s32.totalorder 1, %s23
      %p247 = scmp.lt.s32.totalorder %s23, 5
      %p248 = pnand %p246, %p247
      %p249 = pneg %p248
      // Predicated region
      $region9: #{tpu_custom_call.1} parent=5 // pred_check
        _
      $region10: #{tpu_custom_call.1} parent=5 // pred_check_branch
        %251 = sbr.rel (%p248) target = $region12
      $region11: #{tpu_custom_call.1} parent=5 // pred_region
        %s252 = ssub.s32 %s23, 1
        // Predicated region
        $region13: #{tpu_custom_call.1} parent=11 // pred_check
          %p253 = pneg %p96
        $region14: #{tpu_custom_call.1} parent=11 // pred_check_branch
          %255 = sbr.rel (%p253) target = $region16
        $region15: #{tpu_custom_call.1} parent=11 // pred_region
          %s256 = smul.u32 96, %s35
          %s258 = ssub.s32 6144, 6144
          %259 = vsyncadd [#allocation6], %s258
          %s260 = smul.addr %s256, 64
          %s261 = scalar_lea.hbm %s1, %s260
          %s262 = sshll.u32 [#allocation5], 4
          %s263 = int_to_ptr.vmem [resolvable:$true] %s262
          %268 = dma.hbm_to_vmem [thread:$0]  %s261, 6144, %s263, [#allocation6], 64, 64, 4
        $region16: #{tpu_custom_call.1} parent=11 // pred_fallthru
          _
      $region12: #{tpu_custom_call.1} parent=5 // pred_fallthru
        _
      %p269 = scmp.lt.s32.totalorder %s23, 4
      // Predicated region
      $region17: #{tpu_custom_call.1} parent=5 // pred_check
        %p270 = pneg %p269
      $region18: #{tpu_custom_call.1} parent=5 // pred_check_branch
        %272 = sbr.rel (%p270) target = $region20
      $region19: #{tpu_custom_call.1} parent=5 // pred_region
        // Predicated region
        $region21: #{tpu_custom_call.1} parent=19 // pred_check
          %p273 = pneg %p64
        $region22: #{tpu_custom_call.1} parent=19 // pred_check_branch
          %275 = sbr.rel (%p273) target = $region24
        $region23: #{tpu_custom_call.1} parent=19 // pred_region
          %s276 = sand.u32 %s23, 1
          %s277 = scalar_lea.sflag [#allocation3], %s276
          %s278 = sand.u32 %s54, 1
          %s279 = smul.addr %s278, 32
          %s280 = scalar_lea.vmem [#allocation2], %s279
          %s281 = smul.u32 8, %s31
          %s283 = ssub.s32 512, 512
          %284 = vsyncadd %s277, %s283
          %s285 = smul.addr %s30, 16
          %s286 = sadd.s32 %s281, %s285
          %s287 = smul.addr %s286, 64
          %s288 = scalar_lea.hbm %s0, %s287
          %s289 = sshll.u32 %s280, 4
          %s290 = int_to_ptr.vmem [resolvable:$true] %s289
          %295 = dma.hbm_to_vmem [thread:$0]  %s288, 512, %s290, %s277, 64, 64, 4
        $region24: #{tpu_custom_call.1} parent=19 // pred_fallthru
          _
        // Predicated region
        $region25: #{tpu_custom_call.1} parent=19 // pred_check
          %p296 = pneg %p116
        $region26: #{tpu_custom_call.1} parent=19 // pred_check_branch
          %298 = sbr.rel (%p296) target = $region28
        $region27: #{tpu_custom_call.1} parent=19 // pred_region
          %s299 = sand.u32 %s23, 1
          %s300 = scalar_lea.sflag [#allocation3], %s299
          %s301 = sand.u32 %s106, 1
          %s302 = smul.addr %s301, 64
          %s303 = scalar_lea.vmem [#allocation7], %s302
          %s304 = smul.u32 8, %s31
          %s306 = ssub.s32 1024, 1024
          %307 = vsyncadd %s300, %s306
          %s308 = smul.addr %s304, 128
          %s309 = scalar_lea.hbm %s2, %s308
          %s310 = sshll.u32 %s303, 4
          %s311 = int_to_ptr.vmem [resolvable:$true] %s310
          %316 = dma.hbm_to_vmem [thread:$0]  %s309, 1024, %s311, %s300, 128, 128, 8
        $region28: #{tpu_custom_call.1} parent=19 // pred_fallthru
          _
        // Predicated region
        $region29: #{tpu_custom_call.1} parent=19 // pred_check
          %p317 = pneg %p142
        $region30: #{tpu_custom_call.1} parent=19 // pred_check_branch
          %319 = sbr.rel (%p317) target = $region32
        $region31: #{tpu_custom_call.1} parent=19 // pred_region
          %s320 = sand.u32 %s23, 1
          %s321 = scalar_lea.sflag [#allocation3], %s320
          %s322 = sand.u32 %s132, 1
          %s323 = smul.addr %s322, 64
          %s324 = scalar_lea.vmem [#allocation8], %s323
          %s325 = smul.u32 8, %s31
          %s327 = ssub.s32 1024, 1024
          %328 = vsyncadd %s321, %s327
          %s329 = smul.addr %s325, 128
          %s330 = scalar_lea.hbm %s3, %s329
          %s331 = sshll.u32 %s324, 4
          %s332 = int_to_ptr.vmem [resolvable:$true] %s331
          %337 = dma.hbm_to_vmem [thread:$0]  %s330, 1024, %s332, %s321, 128, 128, 8
        $region32: #{tpu_custom_call.1} parent=19 // pred_fallthru
          _
      $region20: #{tpu_custom_call.1} parent=5 // pred_fallthru
        _
      %p338 = scmp.le.s32.totalorder 1, %s23
      %p339 = scmp.lt.s32.totalorder %s23, 5
      %p340 = pnand %p338, %p339
      %p341 = pneg %p340
      // Predicated region
      $region33: #{tpu_custom_call.1} parent=5 // pred_check
        _
      $region34: #{tpu_custom_call.1} parent=5 // pred_check_branch
        %343 = sbr.rel (%p340) target = $region36
      $region35: #{tpu_custom_call.1} parent=5 // pred_region
        %s344 = ssub.s32 %s23, 1
        %s345 = sand.u32 %s28, 1
        %s346 = scalar_lea.sflag [#allocation3], %s345
        %s347 = sand.u32 %s57, 1
        %s348 = smul.addr %s347, 32
        %s349 = scalar_lea.vmem [#allocation2], %s348
        // Predicated region
        $region37: #{tpu_custom_call.1} parent=35 // pred_check
          %p350 = pneg %p70
        $region38: #{tpu_custom_call.1} parent=35 // pred_check_branch
          %352 = sbr.rel (%p350) target = $region40
        $region39: #{tpu_custom_call.1} parent=35 // pred_region
          %353 = dma.done %s346, 512
        $region40: #{tpu_custom_call.1} parent=35 // pred_fallthru
          _
        // Predicated region
        $region41: #{tpu_custom_call.1} parent=35 // pred_check
          %p354 = pneg %p96
        $region42: #{tpu_custom_call.1} parent=35 // pred_check_branch
          %356 = sbr.rel (%p354) target = $region44
        $region43: #{tpu_custom_call.1} parent=35 // pred_region
          %357 = dma.done [#allocation6], 6144
        $region44: #{tpu_custom_call.1} parent=35 // pred_fallthru
          _
        %s358 = sand.u32 %s28, 1
        %s359 = scalar_lea.sflag [#allocation3], %s358
        %s360 = sand.u32 %s109, 1
        %s361 = smul.addr %s360, 64
        %s362 = scalar_lea.vmem [#allocation7], %s361
        // Predicated region
        $region45: #{tpu_custom_call.1} parent=35 // pred_check
          %p363 = pneg %p122
        $region46: #{tpu_custom_call.1} parent=35 // pred_check_branch
          %365 = sbr.rel (%p363) target = $region48
        $region47: #{tpu_custom_call.1} parent=35 // pred_region
          %366 = dma.done %s359, 1024
        $region48: #{tpu_custom_call.1} parent=35 // pred_fallthru
          _
        %s367 = sand.u32 %s28, 1
        %s368 = scalar_lea.sflag [#allocation3], %s367
        %s369 = sand.u32 %s135, 1
        %s370 = smul.addr %s369, 64
        %s371 = scalar_lea.vmem [#allocation8], %s370
        // Predicated region
        $region49: #{tpu_custom_call.1} parent=35 // pred_check
          %p372 = pneg %p148
        $region50: #{tpu_custom_call.1} parent=35 // pred_check_branch
          %374 = sbr.rel (%p372) target = $region52
        $region51: #{tpu_custom_call.1} parent=35 // pred_region
          %375 = dma.done %s368, 1024
        $region52: #{tpu_custom_call.1} parent=35 // pred_fallthru
          _
        %s376 = sand.u32 %s28, 1
        %s377 = scalar_lea.sflag [#allocation3], %s376
        %s378 = sand.u32 %s57, 1
        %s379 = smul.addr %s378, 32
        %s380 = scalar_lea.vmem [#allocation2], %s379
        %p381 = pneg %p70
        %p382 = pneg %p67
        %p383 = pneg %p96
        %p384 = pneg %p93
        %s385 = sand.u32 %s28, 1
        %s386 = scalar_lea.sflag [#allocation3], %s385
        %s387 = sand.u32 %s109, 1
        %s388 = smul.addr %s387, 64
        %s389 = scalar_lea.vmem [#allocation7], %s388
        %p390 = pneg %p122
        %p391 = pneg %p119
        %s392 = sand.u32 %s28, 1
        %s393 = scalar_lea.sflag [#allocation3], %s392
        %s394 = sand.u32 %s135, 1
        %s395 = smul.addr %s394, 64
        %s396 = scalar_lea.vmem [#allocation8], %s395
        %p397 = pneg %p148
        %p398 = pneg %p145
        %p399 = pneg %p178
        %p400 = pneg %p175
        %s401 = sand.u32 %s165, 1
        %s402 = scalar_lea.sflag [#allocation4], %s401
        %s403 = sand.u32 %s165, 1
        %s404 = smul.addr %s403, 64
        %s405 = scalar_lea.vmem [#allocation9], %s404
        %p406 = pneg %p208
        %p407 = pneg %p205
        %s408 = sand.u32 %s28, 1
        %s409 = scalar_lea.sflag [#allocation11], %s408
        %s410 = sand.u32 %s195, 1
        %s411 = smul.addr %s410, 64
        %s412 = scalar_lea.vmem [#allocation10], %s411
        %p413 = pneg %p238
        %p414 = pneg %p235
        %s415 = sand.u32 %s28, 1
        %s416 = scalar_lea.sflag [#allocation11], %s415
        %s417 = sand.u32 %s225, 1
        %s418 = smul.addr %s417, 64
        %s419 = scalar_lea.vmem [#allocation12], %s418
        %s420 = smul.u32 8, %s34
        %s421 = smul.u32 96, %s35
        %s422 = smul.u32 8, %s34
        %s423 = smul.u32 8, %s34
        %s424 = smul.u32 2, %s35
        %s425 = smul.u32 8, %s34
        %s426 = smul.u32 2, %s35
        %s427 = smul.u32 8, %s34
        %s428 = smul.u32 2, %s35
        %s429 = smul.u32 8, %s34
        %v431 = vld [vmem:[%s349] sm:$0xf]
        %v432 = vld [vmem:[%s349 + $0x4] sm:$0xf]
        %v433 = vld [vmem:[%s349 + $0x8] sm:$0xf]
        %v434 = vld [vmem:[%s349 + $0xc] sm:$0xf]
        %v435 = vld [vmem:[%s349 + $0x10] sm:$0xf]
        %v436 = vld [vmem:[%s349 + $0x14] sm:$0xf]
        %v437 = vld [vmem:[%s349 + $0x18] sm:$0xf]
        %v438 = vld [vmem:[%s349 + $0x1c] sm:$0xf]
        %v439 = vld [vmem:[#allocation5] sm:$0xf]
        %v440 = vld [vmem:[#allocation5 + $0x4] sm:$0xf]
        %v441 = vld [vmem:[#allocation5 + $0x8] sm:$0xf]
        %v442 = vld [vmem:[#allocation5 + $0xc] sm:$0xf]
        %v443 = vld [vmem:[#allocation5 + $0x10] sm:$0xf]
        %v444 = vld [vmem:[#allocation5 + $0x14] sm:$0xf]
        %v445 = vld [vmem:[#allocation5 + $0x18] sm:$0xf]
        %v446 = vld [vmem:[#allocation5 + $0x1c] sm:$0xf]
        %v447 = vld [vmem:[#allocation5 + $0x20] sm:$0xf]
        %v448 = vld [vmem:[#allocation5 + $0x24] sm:$0xf]
        %v449 = vld [vmem:[#allocation5 + $0x28] sm:$0xf]
        %v450 = vld [vmem:[#allocation5 + $0x2c] sm:$0xf]
        %v451 = vld [vmem:[#allocation5 + $0x30] sm:$0xf]
        %v452 = vld [vmem:[#allocation5 + $0x34] sm:$0xf]
        %v453 = vld [vmem:[#allocation5 + $0x38] sm:$0xf]
        %v454 = vld [vmem:[#allocation5 + $0x3c] sm:$0xf]
        %v455 = vld [vmem:[#allocation5 + $0x40] sm:$0xf]
        %v456 = vld [vmem:[#allocation5 + $0x44] sm:$0xf]
        %v457 = vld [vmem:[#allocation5 + $0x48] sm:$0xf]
        %v458 = vld [vmem:[#allocation5 + $0x4c] sm:$0xf]
        %v459 = vld [vmem:[#allocation5 + $0x50] sm:$0xf]
        %v460 = vld [vmem:[#allocation5 + $0x54] sm:$0xf]
        %v461 = vld [vmem:[#allocation5 + $0x58] sm:$0xf]
        %v462 = vld [vmem:[#allocation5 + $0x5c] sm:$0xf]
        %v463 = vld [vmem:[#allocation5 + $0x60] sm:$0xf]
        %v464 = vld [vmem:[#allocation5 + $0x64] sm:$0xf]
        %v465 = vld [vmem:[#allocation5 + $0x68] sm:$0xf]
        %v466 = vld [vmem:[#allocation5 + $0x6c] sm:$0xf]
        %v467 = vld [vmem:[#allocation5 + $0x70] sm:$0xf]
        %v468 = vld [vmem:[#allocation5 + $0x74] sm:$0xf]
        %v469 = vld [vmem:[#allocation5 + $0x78] sm:$0xf]
        %v470 = vld [vmem:[#allocation5 + $0x7c] sm:$0xf]
        %v471 = vld [vmem:[#allocation5 + $0x80] sm:$0xf]
        %v472 = vld [vmem:[#allocation5 + $0x84] sm:$0xf]
        %v473 = vld [vmem:[#allocation5 + $0x88] sm:$0xf]
        %v474 = vld [vmem:[#allocation5 + $0x8c] sm:$0xf]
        %v475 = vld [vmem:[#allocation5 + $0x90] sm:$0xf]
        %v476 = vld [vmem:[#allocation5 + $0x94] sm:$0xf]
        %v477 = vld [vmem:[#allocation5 + $0x98] sm:$0xf]
        %v478 = vld [vmem:[#allocation5 + $0x9c] sm:$0xf]
        %v479 = vld [vmem:[#allocation5 + $0xa0] sm:$0xf]
        %v480 = vld [vmem:[#allocation5 + $0xa4] sm:$0xf]
        %v481 = vld [vmem:[#allocation5 + $0xa8] sm:$0xf]
        %v482 = vld [vmem:[#allocation5 + $0xac] sm:$0xf]
        %v483 = vld [vmem:[#allocation5 + $0xb0] sm:$0xf]
        %v484 = vld [vmem:[#allocation5 + $0xb4] sm:$0xf]
        %v485 = vld [vmem:[#allocation5 + $0xb8] sm:$0xf]
        %v486 = vld [vmem:[#allocation5 + $0xbc] sm:$0xf]
        %v487 = vld [vmem:[#allocation5 + $0xc0] sm:$0xf]
        %v488 = vld [vmem:[#allocation5 + $0xc4] sm:$0xf]
        %v489 = vld [vmem:[#allocation5 + $0xc8] sm:$0xf]
        %v490 = vld [vmem:[#allocation5 + $0xcc] sm:$0xf]
        %v491 = vld [vmem:[#allocation5 + $0xd0] sm:$0xf]
        %v492 = vld [vmem:[#allocation5 + $0xd4] sm:$0xf]
        %v493 = vld [vmem:[#allocation5 + $0xd8] sm:$0xf]
        %v494 = vld [vmem:[#allocation5 + $0xdc] sm:$0xf]
        %v495 = vld [vmem:[#allocation5 + $0xe0] sm:$0xf]
        %v496 = vld [vmem:[#allocation5 + $0xe4] sm:$0xf]
        %v497 = vld [vmem:[#allocation5 + $0xe8] sm:$0xf]
        %v498 = vld [vmem:[#allocation5 + $0xec] sm:$0xf]
        %v499 = vld [vmem:[#allocation5 + $0xf0] sm:$0xf]
        %v500 = vld [vmem:[#allocation5 + $0xf4] sm:$0xf]
        %v501 = vld [vmem:[#allocation5 + $0xf8] sm:$0xf]
        %v502 = vld [vmem:[#allocation5 + $0xfc] sm:$0xf]
        %v503 = vld [vmem:[#allocation5 + $0x100] sm:$0xf]
        %v504 = vld [vmem:[#allocation5 + $0x104] sm:$0xf]
        %v505 = vld [vmem:[#allocation5 + $0x108] sm:$0xf]
        %v506 = vld [vmem:[#allocation5 + $0x10c] sm:$0xf]
        %v507 = vld [vmem:[#allocation5 + $0x110] sm:$0xf]
        %v508 = vld [vmem:[#allocation5 + $0x114] sm:$0xf]
        %v509 = vld [vmem:[#allocation5 + $0x118] sm:$0xf]
        %v510 = vld [vmem:[#allocation5 + $0x11c] sm:$0xf]
        %v511 = vld [vmem:[#allocation5 + $0x120] sm:$0xf]
        %v512 = vld [vmem:[#allocation5 + $0x124] sm:$0xf]
        %v513 = vld [vmem:[#allocation5 + $0x128] sm:$0xf]
        %v514 = vld [vmem:[#allocation5 + $0x12c] sm:$0xf]
        %v515 = vld [vmem:[#allocation5 + $0x130] sm:$0xf]
        %v516 = vld [vmem:[#allocation5 + $0x134] sm:$0xf]
        %v517 = vld [vmem:[#allocation5 + $0x138] sm:$0xf]
        %v518 = vld [vmem:[#allocation5 + $0x13c] sm:$0xf]
        %v519 = vld [vmem:[#allocation5 + $0x140] sm:$0xf]
        %v520 = vld [vmem:[#allocation5 + $0x144] sm:$0xf]
        %v521 = vld [vmem:[#allocation5 + $0x148] sm:$0xf]
        %v522 = vld [vmem:[#allocation5 + $0x14c] sm:$0xf]
        %v523 = vld [vmem:[#allocation5 + $0x150] sm:$0xf]
        %v524 = vld [vmem:[#allocation5 + $0x154] sm:$0xf]
        %v525 = vld [vmem:[#allocation5 + $0x158] sm:$0xf]
        %v526 = vld [vmem:[#allocation5 + $0x15c] sm:$0xf]
        %v527 = vld [vmem:[#allocation5 + $0x160] sm:$0xf]
        %v528 = vld [vmem:[#allocation5 + $0x164] sm:$0xf]
        %v529 = vld [vmem:[#allocation5 + $0x168] sm:$0xf]
        %v530 = vld [vmem:[#allocation5 + $0x16c] sm:$0xf]
        %v531 = vld [vmem:[#allocation5 + $0x170] sm:$0xf]
        %v532 = vld [vmem:[#allocation5 + $0x174] sm:$0xf]
        %v533 = vld [vmem:[#allocation5 + $0x178] sm:$0xf]
        %v534 = vld [vmem:[#allocation5 + $0x17c] sm:$0xf]
        %v543 = vunpack.c.l.b16 %v431
        %v544 = vunpack.c.l.b16 %v432
        %v545 = vunpack.c.l.b16 %v433
        %v546 = vunpack.c.l.b16 %v434
        %v547 = vunpack.c.l.b16 %v435
        %v548 = vunpack.c.l.b16 %v436
        %v549 = vunpack.c.l.b16 %v437
        %v550 = vunpack.c.l.b16 %v438
        %v551 = vpack.c.b16 %v544, %v543
        %v552 = vpack.c.b16 %v546, %v545
        %v553 = vpack.c.b16 %v548, %v547
        %v554 = vpack.c.b16 %v550, %v549
        %v655 = vunpack.c.l.b16 %v439
        %v656 = vunpack.c.l.b16 %v440
        %v657 = vunpack.c.l.b16 %v441
        %v658 = vunpack.c.l.b16 %v442
        %v659 = vunpack.c.l.b16 %v443
        %v660 = vunpack.c.l.b16 %v444
        %v661 = vunpack.c.l.b16 %v445
        %v662 = vunpack.c.l.b16 %v446
        %v663 = vunpack.c.l.b16 %v447
        %v664 = vunpack.c.l.b16 %v448
        %v665 = vunpack.c.l.b16 %v449
        %v666 = vunpack.c.l.b16 %v450
        %v667 = vunpack.c.l.b16 %v451
        %v668 = vunpack.c.l.b16 %v452
        %v669 = vunpack.c.l.b16 %v453
        %v670 = vunpack.c.l.b16 %v454
        %v671 = vunpack.c.l.b16 %v455
        %v672 = vunpack.c.l.b16 %v456
        %v673 = vunpack.c.l.b16 %v457
        %v674 = vunpack.c.l.b16 %v458
        %v675 = vunpack.c.l.b16 %v459
        %v676 = vunpack.c.l.b16 %v460
        %v677 = vunpack.c.l.b16 %v461
        %v678 = vunpack.c.l.b16 %v462
        %v679 = vunpack.c.l.b16 %v463
        %v680 = vunpack.c.l.b16 %v464
        %v681 = vunpack.c.l.b16 %v465
        %v682 = vunpack.c.l.b16 %v466
        %v683 = vunpack.c.l.b16 %v467
        %v684 = vunpack.c.l.b16 %v468
        %v685 = vunpack.c.l.b16 %v469
        %v686 = vunpack.c.l.b16 %v470
        %v687 = vunpack.c.l.b16 %v471
        %v688 = vunpack.c.l.b16 %v472
        %v689 = vunpack.c.l.b16 %v473
        %v690 = vunpack.c.l.b16 %v474
        %v691 = vunpack.c.l.b16 %v475
        %v692 = vunpack.c.l.b16 %v476
        %v693 = vunpack.c.l.b16 %v477
        %v694 = vunpack.c.l.b16 %v478
        %v695 = vunpack.c.l.b16 %v479
        %v696 = vunpack.c.l.b16 %v480
        %v697 = vunpack.c.l.b16 %v481
        %v698 = vunpack.c.l.b16 %v482
        %v699 = vunpack.c.l.b16 %v483
        %v700 = vunpack.c.l.b16 %v484
        %v701 = vunpack.c.l.b16 %v485
        %v702 = vunpack.c.l.b16 %v486
        %v703 = vunpack.c.l.b16 %v487
        %v704 = vunpack.c.l.b16 %v488
        %v705 = vunpack.c.l.b16 %v489
        %v706 = vunpack.c.l.b16 %v490
        %v707 = vunpack.c.l.b16 %v491
        %v708 = vunpack.c.l.b16 %v492
        %v709 = vunpack.c.l.b16 %v493
        %v710 = vunpack.c.l.b16 %v494
        %v711 = vunpack.c.l.b16 %v495
        %v712 = vunpack.c.l.b16 %v496
        %v713 = vunpack.c.l.b16 %v497
        %v714 = vunpack.c.l.b16 %v498
        %v715 = vunpack.c.l.b16 %v499
        %v716 = vunpack.c.l.b16 %v500
        %v717 = vunpack.c.l.b16 %v501
        %v718 = vunpack.c.l.b16 %v502
        %v719 = vunpack.c.l.b16 %v503
        %v720 = vunpack.c.l.b16 %v504
        %v721 = vunpack.c.l.b16 %v505
        %v722 = vunpack.c.l.b16 %v506
        %v723 = vunpack.c.l.b16 %v507
        %v724 = vunpack.c.l.b16 %v508
        %v725 = vunpack.c.l.b16 %v509
        %v726 = vunpack.c.l.b16 %v510
        %v727 = vunpack.c.l.b16 %v511
        %v728 = vunpack.c.l.b16 %v512
        %v729 = vunpack.c.l.b16 %v513
        %v730 = vunpack.c.l.b16 %v514
        %v731 = vunpack.c.l.b16 %v515
        %v732 = vunpack.c.l.b16 %v516
        %v733 = vunpack.c.l.b16 %v517
        %v734 = vunpack.c.l.b16 %v518
        %v735 = vunpack.c.l.b16 %v519
        %v736 = vunpack.c.l.b16 %v520
        %v737 = vunpack.c.l.b16 %v521
        %v738 = vunpack.c.l.b16 %v522
        %v739 = vunpack.c.l.b16 %v523
        %v740 = vunpack.c.l.b16 %v524
        %v741 = vunpack.c.l.b16 %v525
        %v742 = vunpack.c.l.b16 %v526
        %v743 = vunpack.c.l.b16 %v527
        %v744 = vunpack.c.l.b16 %v528
        %v745 = vunpack.c.l.b16 %v529
        %v746 = vunpack.c.l.b16 %v530
        %v747 = vunpack.c.l.b16 %v531
        %v748 = vunpack.c.l.b16 %v532
        %v749 = vunpack.c.l.b16 %v533
        %v750 = vunpack.c.l.b16 %v534
        %v751 = vpack.c.b16 %v656, %v655
        %v752 = vpack.c.b16 %v658, %v657
        %v753 = vpack.c.b16 %v660, %v659
        %v754 = vpack.c.b16 %v662, %v661
        %v755 = vpack.c.b16 %v664, %v663
        %v756 = vpack.c.b16 %v666, %v665
        %v757 = vpack.c.b16 %v668, %v667
        %v758 = vpack.c.b16 %v670, %v669
        %v759 = vpack.c.b16 %v672, %v671
        %v760 = vpack.c.b16 %v674, %v673
        %v761 = vpack.c.b16 %v676, %v675
        %v762 = vpack.c.b16 %v678, %v677
        %v763 = vpack.c.b16 %v680, %v679
        %v764 = vpack.c.b16 %v682, %v681
        %v765 = vpack.c.b16 %v684, %v683
        %v766 = vpack.c.b16 %v686, %v685
        %v767 = vpack.c.b16 %v688, %v687
        %v768 = vpack.c.b16 %v690, %v689
        %v769 = vpack.c.b16 %v692, %v691
        %v770 = vpack.c.b16 %v694, %v693
        %v771 = vpack.c.b16 %v696, %v695
        %v772 = vpack.c.b16 %v698, %v697
        %v773 = vpack.c.b16 %v700, %v699
        %v774 = vpack.c.b16 %v702, %v701
        %v775 = vpack.c.b16 %v704, %v703
        %v776 = vpack.c.b16 %v706, %v705
        %v777 = vpack.c.b16 %v708, %v707
        %v778 = vpack.c.b16 %v710, %v709
        %v779 = vpack.c.b16 %v712, %v711
        %v780 = vpack.c.b16 %v714, %v713
        %v781 = vpack.c.b16 %v716, %v715
        %v782 = vpack.c.b16 %v718, %v717
        %v783 = vpack.c.b16 %v720, %v719
        %v784 = vpack.c.b16 %v722, %v721
        %v785 = vpack.c.b16 %v724, %v723
        %v786 = vpack.c.b16 %v726, %v725
        %v787 = vpack.c.b16 %v728, %v727
        %v788 = vpack.c.b16 %v730, %v729
        %v789 = vpack.c.b16 %v732, %v731
        %v790 = vpack.c.b16 %v734, %v733
        %v791 = vpack.c.b16 %v736, %v735
        %v792 = vpack.c.b16 %v738, %v737
        %v793 = vpack.c.b16 %v740, %v739
        %v794 = vpack.c.b16 %v742, %v741
        %v795 = vpack.c.b16 %v744, %v743
        %v796 = vpack.c.b16 %v746, %v745
        %v797 = vpack.c.b16 %v748, %v747
        %v798 = vpack.c.b16 %v750, %v749
        %847 = vmatprep.subr.bf16.mxu0 0
        %848 = vmatpush1.bf16.xpose.msra.mxu0 %v758
        %849 = vmatprep.subr.bf16.mxu0 0
        %850 = vmatpush1.bf16.xpose.msra.mxu0 %v757
        %851 = vmatprep.subr.bf16.mxu0 0
        %852 = vmatpush1.bf16.xpose.msra.mxu0 %v756
        %853 = vmatprep.subr.bf16.mxu0 0
        %854 = vmatpush1.bf16.xpose.msra.mxu0 %v755
        %855 = vmatprep.subr.bf16.mxu0 0
        %856 = vmatpush1.bf16.xpose.msra.mxu0 %v754
        %857 = vmatprep.subr.bf16.mxu0 0
        %858 = vmatpush1.bf16.xpose.msra.mxu0 %v753
        %859 = vmatprep.subr.bf16.mxu0 0
        %860 = vmatpush1.bf16.xpose.msra.mxu0 %v752
        %861 = vmatprep.subr.bf16.mxu0 0
        %862 = vmatpush1.bf16.xpose.msra.mxu0 %v751
        %863 = vmatprep.subr.bf16.mxu0 0
        %864 = vmatpush2.bf16.xpose.msra.mxu0 %v766
        %865 = vmatprep.subr.bf16.mxu0 0
        %866 = vmatpush2.bf16.xpose.msra.mxu0 %v765
        %867 = vmatprep.subr.bf16.mxu0 0
        %868 = vmatpush2.bf16.xpose.msra.mxu0 %v764
        %869 = vmatprep.subr.bf16.mxu0 0
        %870 = vmatpush2.bf16.xpose.msra.mxu0 %v763
        %871 = vmatprep.subr.bf16.mxu0 0
        %872 = vmatpush2.bf16.xpose.msra.mxu0 %v762
        %873 = vmatprep.subr.bf16.mxu0 0
        %874 = vmatpush2.bf16.xpose.msra.mxu0 %v761
        %875 = vmatprep.subr.bf16.mxu0 0
        %876 = vmatpush2.bf16.xpose.msra.mxu0 %v760
        %877 = vmatprep.subr.bf16.mxu0 0
        %878 = vmatpush2.bf16.xpose.msra.mxu0 %v759
        %879 = vmatprep.mubr.bf16.mxu0 0
        %880 = vmatmul.mubr.bf16.gmra.mxu0 %v551
        %v881 = vpop.f32.mrf.mxu0
        %v882 = vadd.f32 0.0, %v881
        %v883 = vpop.f32.mrf.mxu0
        %v884 = vadd.f32 0.0, %v883
        %v885 = vpop.f32.mrf.mxu0
        %v886 = vadd.f32 0.0, %v885
        %v887 = vpop.f32.mrf.mxu0
        %v888 = vadd.f32 0.0, %v887
        %889 = vmatprep.mubr.bf16.mxu0 0
        %890 = vmatmul.mubr.bf16.gmra.mxu0 %v552
        %v891 = vpop.f32.mrf.mxu0
        %v892 = vadd.f32 0.0, %v891
        %v893 = vpop.f32.mrf.mxu0
        %v894 = vadd.f32 0.0, %v893
        %v895 = vpop.f32.mrf.mxu0
        %v896 = vadd.f32 0.0, %v895
        %v897 = vpop.f32.mrf.mxu0
        %v898 = vadd.f32 0.0, %v897
        %899 = vmatprep.mubr.bf16.mxu0 0
        %900 = vmatmul.mubr.bf16.gmra.mxu0 %v553
        %v901 = vpop.f32.mrf.mxu0
        %v902 = vadd.f32 0.0, %v901
        %v903 = vpop.f32.mrf.mxu0
        %v904 = vadd.f32 0.0, %v903
        %v905 = vpop.f32.mrf.mxu0
        %v906 = vadd.f32 0.0, %v905
        %v907 = vpop.f32.mrf.mxu0
        %v908 = vadd.f32 0.0, %v907
        %909 = vmatprep.mubr.bf16.mxu0 0
        %910 = vmatmul.mubr.bf16.gmra.mxu0 %v554
        %v911 = vpop.f32.mrf.mxu0
        %v912 = vadd.f32 0.0, %v911
        %v913 = vpop.f32.mrf.mxu0
        %v914 = vadd.f32 0.0, %v913
        %v915 = vpop.f32.mrf.mxu0
        %v916 = vadd.f32 0.0, %v915
        %v917 = vpop.f32.mrf.mxu0
        %v918 = vadd.f32 0.0, %v917
        %919 = vdwg.mxu0
        %920 = vmatprep.subr.bf16.mxu0 0
        %921 = vmatpush1.bf16.xpose.msra.mxu0 %v774
        %922 = vmatprep.subr.bf16.mxu0 0
        %923 = vmatpush1.bf16.xpose.msra.mxu0 %v773
        %924 = vmatprep.subr.bf16.mxu0 0
        %925 = vmatpush1.bf16.xpose.msra.mxu0 %v772
        %926 = vmatprep.subr.bf16.mxu0 0
        %927 = vmatpush1.bf16.xpose.msra.mxu0 %v771
        %928 = vmatprep.subr.bf16.mxu0 0
        %929 = vmatpush1.bf16.xpose.msra.mxu0 %v770
        %930 = vmatprep.subr.bf16.mxu0 0
        %931 = vmatpush1.bf16.xpose.msra.mxu0 %v769
        %932 = vmatprep.subr.bf16.mxu0 0
        %933 = vmatpush1.bf16.xpose.msra.mxu0 %v768
        %934 = vmatprep.subr.bf16.mxu0 0
        %935 = vmatpush1.bf16.xpose.msra.mxu0 %v767
        %936 = vmatprep.subr.bf16.mxu0 0
        %937 = vmatpush2.bf16.xpose.msra.mxu0 %v782
        %938 = vmatprep.subr.bf16.mxu0 0
        %939 = vmatpush2.bf16.xpose.msra.mxu0 %v781
        %940 = vmatprep.subr.bf16.mxu0 0
        %941 = vmatpush2.bf16.xpose.msra.mxu0 %v780
        %942 = vmatprep.subr.bf16.mxu0 0
        %943 = vmatpush2.bf16.xpose.msra.mxu0 %v779
        %944 = vmatprep.subr.bf16.mxu0 0
        %945 = vmatpush2.bf16.xpose.msra.mxu0 %v778
        %946 = vmatprep.subr.bf16.mxu0 0
        %947 = vmatpush2.bf16.xpose.msra.mxu0 %v777
        %948 = vmatprep.subr.bf16.mxu0 0
        %949 = vmatpush2.bf16.xpose.msra.mxu0 %v776
        %950 = vmatprep.subr.bf16.mxu0 0
        %951 = vmatpush2.bf16.xpose.msra.mxu0 %v775
        %952 = vmatprep.mubr.bf16.mxu0 0
        %953 = vmatmul.mubr.bf16.gmra.mxu0 %v551
        %v954 = vpop.f32.mrf.mxu0
        %v955 = vadd.f32 0.0, %v954
        %v956 = vpop.f32.mrf.mxu0
        %v957 = vadd.f32 0.0, %v956
        %v958 = vpop.f32.mrf.mxu0
        %v959 = vadd.f32 0.0, %v958
        %v960 = vpop.f32.mrf.mxu0
        %v961 = vadd.f32 0.0, %v960
        %962 = vmatprep.mubr.bf16.mxu0 0
        %963 = vmatmul.mubr.bf16.gmra.mxu0 %v552
        %v964 = vpop.f32.mrf.mxu0
        %v965 = vadd.f32 0.0, %v964
        %v966 = vpop.f32.mrf.mxu0
        %v967 = vadd.f32 0.0, %v966
        %v968 = vpop.f32.mrf.mxu0
        %v969 = vadd.f32 0.0, %v968
        %v970 = vpop.f32.mrf.mxu0
        %v971 = vadd.f32 0.0, %v970
        %972 = vmatprep.mubr.bf16.mxu0 0
        %973 = vmatmul.mubr.bf16.gmra.mxu0 %v553
        %v974 = vpop.f32.mrf.mxu0
        %v975 = vadd.f32 0.0, %v974
        %v976 = vpop.f32.mrf.mxu0
        %v977 = vadd.f32 0.0, %v976
        %v978 = vpop.f32.mrf.mxu0
        %v979 = vadd.f32 0.0, %v978
        %v980 = vpop.f32.mrf.mxu0
        %v981 = vadd.f32 0.0, %v980
        %982 = vmatprep.mubr.bf16.mxu0 0
        %983 = vmatmul.mubr.bf16.gmra.mxu0 %v554
        %v984 = vpop.f32.mrf.mxu0
        %v985 = vadd.f32 0.0, %v984
        %v986 = vpop.f32.mrf.mxu0
        %v987 = vadd.f32 0.0, %v986
        %v988 = vpop.f32.mrf.mxu0
        %v989 = vadd.f32 0.0, %v988
        %v990 = vpop.f32.mrf.mxu0
        %v991 = vadd.f32 0.0, %v990
        %992 = vdwg.mxu0
        %993 = vmatprep.subr.bf16.mxu0 0
        %994 = vmatpush1.bf16.xpose.msra.mxu0 %v790
        %995 = vmatprep.subr.bf16.mxu0 0
        %996 = vmatpush1.bf16.xpose.msra.mxu0 %v789
        %997 = vmatprep.subr.bf16.mxu0 0
        %998 = vmatpush1.bf16.xpose.msra.mxu0 %v788
        %999 = vmatprep.subr.bf16.mxu0 0
        %1000 = vmatpush1.bf16.xpose.msra.mxu0 %v787
        %1001 = vmatprep.subr.bf16.mxu0 0
        %1002 = vmatpush1.bf16.xpose.msra.mxu0 %v786
        %1003 = vmatprep.subr.bf16.mxu0 0
        %1004 = vmatpush1.bf16.xpose.msra.mxu0 %v785
        %1005 = vmatprep.subr.bf16.mxu0 0
        %1006 = vmatpush1.bf16.xpose.msra.mxu0 %v784
        %1007 = vmatprep.subr.bf16.mxu0 0
        %1008 = vmatpush1.bf16.xpose.msra.mxu0 %v783
        %1009 = vmatprep.subr.bf16.mxu0 0
        %1010 = vmatpush2.bf16.xpose.msra.mxu0 %v798
        %1011 = vmatprep.subr.bf16.mxu0 0
        %1012 = vmatpush2.bf16.xpose.msra.mxu0 %v797
        %1013 = vmatprep.subr.bf16.mxu0 0
        %1014 = vmatpush2.bf16.xpose.msra.mxu0 %v796
        %1015 = vmatprep.subr.bf16.mxu0 0
        %1016 = vmatpush2.bf16.xpose.msra.mxu0 %v795
        %1017 = vmatprep.subr.bf16.mxu0 0
        %1018 = vmatpush2.bf16.xpose.msra.mxu0 %v794
        %1019 = vmatprep.subr.bf16.mxu0 0
        %1020 = vmatpush2.bf16.xpose.msra.mxu0 %v793
        %1021 = vmatprep.subr.bf16.mxu0 0
        %1022 = vmatpush2.bf16.xpose.msra.mxu0 %v792
        %1023 = vmatprep.subr.bf16.mxu0 0
        %1024 = vmatpush2.bf16.xpose.msra.mxu0 %v791
        %1025 = vmatprep.mubr.bf16.mxu0 0
        %1026 = vmatmul.mubr.bf16.gmra.mxu0 %v551
        %v1027 = vpop.f32.mrf.mxu0
        %v1028 = vadd.f32 0.0, %v1027
        %v1029 = vpop.f32.mrf.mxu0
        %v1030 = vadd.f32 0.0, %v1029
        %v1031 = vpop.f32.mrf.mxu0
        %v1032 = vadd.f32 0.0, %v1031
        %v1033 = vpop.f32.mrf.mxu0
        %v1034 = vadd.f32 0.0, %v1033
        %1035 = vmatprep.mubr.bf16.mxu0 0
        %1036 = vmatmul.mubr.bf16.gmra.mxu0 %v552
        %v1037 = vpop.f32.mrf.mxu0
        %v1038 = vadd.f32 0.0, %v1037
        %v1039 = vpop.f32.mrf.mxu0
        %v1040 = vadd.f32 0.0, %v1039
        %v1041 = vpop.f32.mrf.mxu0
        %v1042 = vadd.f32 0.0, %v1041
        %v1043 = vpop.f32.mrf.mxu0
        %v1044 = vadd.f32 0.0, %v1043
        %1045 = vmatprep.mubr.bf16.mxu0 0
        %1046 = vmatmul.mubr.bf16.gmra.mxu0 %v553
        %v1047 = vpop.f32.mrf.mxu0
        %v1048 = vadd.f32 0.0, %v1047
        %v1049 = vpop.f32.mrf.mxu0
        %v1050 = vadd.f32 0.0, %v1049
        %v1051 = vpop.f32.mrf.mxu0
        %v1052 = vadd.f32 0.0, %v1051
        %v1053 = vpop.f32.mrf.mxu0
        %v1054 = vadd.f32 0.0, %v1053
        %1055 = vmatprep.mubr.bf16.mxu0 0
        %1056 = vmatmul.mubr.bf16.gmra.mxu0 %v554
        %v1057 = vpop.f32.mrf.mxu0
        %v1058 = vadd.f32 0.0, %v1057
        %v1059 = vpop.f32.mrf.mxu0
        %v1060 = vadd.f32 0.0, %v1059
        %v1061 = vpop.f32.mrf.mxu0
        %v1062 = vadd.f32 0.0, %v1061
        %v1063 = vpop.f32.mrf.mxu0
        %v1064 = vadd.f32 0.0, %v1063
        %1065 = vdwg.mxu0
        %v1066 = vld [vmem:[%s362] sm:$0xff]
        %v1067 = vld [vmem:[%s362 + $0x8] sm:$0xff]
        %v1068 = vld [vmem:[%s362 + $0x10] sm:$0xff]
        %v1069 = vld [vmem:[%s362 + $0x18] sm:$0xff]
        %v1070 = vld [vmem:[%s362 + $0x20] sm:$0xff]
        %v1071 = vld [vmem:[%s362 + $0x28] sm:$0xff]
        %v1072 = vld [vmem:[%s362 + $0x30] sm:$0xff]
        %v1073 = vld [vmem:[%s362 + $0x38] sm:$0xff]
        %v1074 = vld [vmem:[%s371] sm:$0xff]
        %v1075 = vld [vmem:[%s371 + $0x8] sm:$0xff]
        %v1076 = vld [vmem:[%s371 + $0x10] sm:$0xff]
        %v1077 = vld [vmem:[%s371 + $0x18] sm:$0xff]
        %v1078 = vld [vmem:[%s371 + $0x20] sm:$0xff]
        %v1079 = vld [vmem:[%s371 + $0x28] sm:$0xff]
        %v1080 = vld [vmem:[%s371 + $0x30] sm:$0xff]
        %v1081 = vld [vmem:[%s371 + $0x38] sm:$0xff]
        %v1082 = vmul.f32 %v882, %v1066
        %v1083 = vmul.f32 %v886, %v1067
        %v1084 = vmul.f32 %v892, %v1068
        %v1085 = vmul.f32 %v896, %v1069
        %v1086 = vmul.f32 %v902, %v1070
        %v1087 = vmul.f32 %v906, %v1071
        %v1088 = vmul.f32 %v912, %v1072
        %v1089 = vmul.f32 %v916, %v1073
        %1090 = vrot.lane.b32.xlu0 %v882, 64
        %v1091 = vpop.permute.xlu0 %1090
        %1092 = vrot.lane.b32.xlu0 %v886, 64
        %v1093 = vpop.permute.xlu0 %1092
        %1094 = vrot.lane.b32.xlu0 %v892, 64
        %v1095 = vpop.permute.xlu0 %1094
        %1096 = vrot.lane.b32.xlu0 %v896, 64
        %v1097 = vpop.permute.xlu0 %1096
        %1098 = vrot.lane.b32.xlu0 %v902, 64
        %v1099 = vpop.permute.xlu0 %1098
        %1100 = vrot.lane.b32.xlu0 %v906, 64
        %v1101 = vpop.permute.xlu0 %1100
        %1102 = vrot.lane.b32.xlu0 %v912, 64
        %v1103 = vpop.permute.xlu0 %1102
        %1104 = vrot.lane.b32.xlu0 %v916, 64
        %v1105 = vpop.permute.xlu0 %1104
        %v1106 = vmul.f32 %v1091, %v1074
        %v1107 = vmul.f32 %v1093, %v1075
        %v1108 = vmul.f32 %v1095, %v1076
        %v1109 = vmul.f32 %v1097, %v1077
        %v1110 = vmul.f32 %v1099, %v1078
        %v1111 = vmul.f32 %v1101, %v1079
        %v1112 = vmul.f32 %v1103, %v1080
        %v1113 = vmul.f32 %v1105, %v1081
        %v1114 = vadd.f32 %v1082, %v1106
        %v1115 = vadd.f32 %v1083, %v1107
        %v1116 = vadd.f32 %v1084, %v1108
        %v1117 = vadd.f32 %v1085, %v1109
        %v1118 = vadd.f32 %v1086, %v1110
        %v1119 = vadd.f32 %v1087, %v1111
        %v1120 = vadd.f32 %v1088, %v1112
        %v1121 = vadd.f32 %v1089, %v1113
        %v1122 = vmul.f32 %v1114, 0.088388346
        %v1123 = vmul.f32 %v1115, 0.088388346
        %v1124 = vmul.f32 %v1116, 0.088388346
        %v1125 = vmul.f32 %v1117, 0.088388346
        %v1126 = vmul.f32 %v1118, 0.088388346
        %v1127 = vmul.f32 %v1119, 0.088388346
        %v1128 = vmul.f32 %v1120, 0.088388346
        %v1129 = vmul.f32 %v1121, 0.088388346
        %v1130 = vpack.c.bf16 %v1123, %v1122
        %v1131 = vpack.c.bf16 %v1125, %v1124
        %v1132 = vpack.c.bf16 %v1127, %v1126
        %v1133 = vpack.c.bf16 %v1129, %v1128
        %v1138 = vunpack.c.l.b16 %v1130
        %v1139 = vunpack.c.h.b16 %v1130
        %v1140 = vunpack.c.l.b16 %v1131
        %v1141 = vunpack.c.h.b16 %v1131
        %v1142 = vunpack.c.l.b16 %v1132
        %v1143 = vunpack.c.h.b16 %v1132
        %v1144 = vunpack.c.l.b16 %v1133
        %v1145 = vunpack.c.h.b16 %v1133
        %v1146 = vpack.c.b16 %v1138, %v1138
        %v1147 = vpack.c.b16 %v1139, %v1139
        %v1148 = vpack.c.b16 %v1140, %v1140
        %v1149 = vpack.c.b16 %v1141, %v1141
        %v1150 = vpack.c.b16 %v1142, %v1142
        %v1151 = vpack.c.b16 %v1143, %v1143
        %v1152 = vpack.c.b16 %v1144, %v1144
        %v1153 = vpack.c.b16 %v1145, %v1145
        %1162 = vst [vmem:[%s405] sm:$0xf] %v1146
        %1163 = vst [vmem:[%s405 + $0x4] sm:$0xf] %v1147
        %1164 = vst [vmem:[%s405 + $0x8] sm:$0xf] %v1148
        %1165 = vst [vmem:[%s405 + $0xc] sm:$0xf] %v1149
        %1166 = vst [vmem:[%s405 + $0x10] sm:$0xf] %v1150
        %1167 = vst [vmem:[%s405 + $0x14] sm:$0xf] %v1151
        %1168 = vst [vmem:[%s405 + $0x18] sm:$0xf] %v1152
        %1169 = vst [vmem:[%s405 + $0x1c] sm:$0xf] %v1153
        %v1170 = vmul.f32 %v884, %v1066
        %v1171 = vmul.f32 %v888, %v1067
        %v1172 = vmul.f32 %v894, %v1068
        %v1173 = vmul.f32 %v898, %v1069
        %v1174 = vmul.f32 %v904, %v1070
        %v1175 = vmul.f32 %v908, %v1071
        %v1176 = vmul.f32 %v914, %v1072
        %v1177 = vmul.f32 %v918, %v1073
        %1178 = vrot.lane.b32.xlu0 %v884, 64
        %v1179 = vpop.permute.xlu0 %1178
        %1180 = vrot.lane.b32.xlu0 %v888, 64
        %v1181 = vpop.permute.xlu0 %1180
        %1182 = vrot.lane.b32.xlu0 %v894, 64
        %v1183 = vpop.permute.xlu0 %1182
        %1184 = vrot.lane.b32.xlu0 %v898, 64
        %v1185 = vpop.permute.xlu0 %1184
        %1186 = vrot.lane.b32.xlu0 %v904, 64
        %v1187 = vpop.permute.xlu0 %1186
        %1188 = vrot.lane.b32.xlu0 %v908, 64
        %v1189 = vpop.permute.xlu0 %1188
        %1190 = vrot.lane.b32.xlu0 %v914, 64
        %v1191 = vpop.permute.xlu0 %1190
        %1192 = vrot.lane.b32.xlu0 %v918, 64
        %v1193 = vpop.permute.xlu0 %1192
        %v1194 = vmul.f32 %v1179, %v1074
        %v1195 = vmul.f32 %v1181, %v1075
        %v1196 = vmul.f32 %v1183, %v1076
        %v1197 = vmul.f32 %v1185, %v1077
        %v1198 = vmul.f32 %v1187, %v1078
        %v1199 = vmul.f32 %v1189, %v1079
        %v1200 = vmul.f32 %v1191, %v1080
        %v1201 = vmul.f32 %v1193, %v1081
        %v1202 = vadd.f32 %v1170, %v1194
        %v1203 = vadd.f32 %v1171, %v1195
        %v1204 = vadd.f32 %v1172, %v1196
        %v1205 = vadd.f32 %v1173, %v1197
        %v1206 = vadd.f32 %v1174, %v1198
        %v1207 = vadd.f32 %v1175, %v1199
        %v1208 = vadd.f32 %v1176, %v1200
        %v1209 = vadd.f32 %v1177, %v1201
        %v1210 = vpack.c.bf16 %v1203, %v1202
        %v1211 = vpack.c.bf16 %v1205, %v1204
        %v1212 = vpack.c.bf16 %v1207, %v1206
        %v1213 = vpack.c.bf16 %v1209, %v1208
        %v1218 = vunpack.c.l.b16 %v1210
        %v1219 = vunpack.c.h.b16 %v1210
        %v1220 = vunpack.c.l.b16 %v1211
        %v1221 = vunpack.c.h.b16 %v1211
        %v1222 = vunpack.c.l.b16 %v1212
        %v1223 = vunpack.c.h.b16 %v1212
        %v1224 = vunpack.c.l.b16 %v1213
        %v1225 = vunpack.c.h.b16 %v1213
        %v1226 = vpack.c.b16 %v1218, %v1218
        %v1227 = vpack.c.b16 %v1219, %v1219
        %v1228 = vpack.c.b16 %v1220, %v1220
        %v1229 = vpack.c.b16 %v1221, %v1221
        %v1230 = vpack.c.b16 %v1222, %v1222
        %v1231 = vpack.c.b16 %v1223, %v1223
        %v1232 = vpack.c.b16 %v1224, %v1224
        %v1233 = vpack.c.b16 %v1225, %v1225
        %1242 = vst [vmem:[%s412] sm:$0xf] %v1226
        %1243 = vst [vmem:[%s412 + $0x4] sm:$0xf] %v1227
        %1244 = vst [vmem:[%s412 + $0x8] sm:$0xf] %v1228
        %1245 = vst [vmem:[%s412 + $0xc] sm:$0xf] %v1229
        %1246 = vst [vmem:[%s412 + $0x10] sm:$0xf] %v1230
        %1247 = vst [vmem:[%s412 + $0x14] sm:$0xf] %v1231
        %1248 = vst [vmem:[%s412 + $0x18] sm:$0xf] %v1232
        %1249 = vst [vmem:[%s412 + $0x1c] sm:$0xf] %v1233
        %v1250 = vpack.c.bf16 %v959, %v955
        %v1251 = vpack.c.bf16 %v969, %v965
        %v1252 = vpack.c.bf16 %v979, %v975
        %v1253 = vpack.c.bf16 %v989, %v985
        %v1258 = vunpack.c.l.b16 %v1250
        %v1259 = vunpack.c.h.b16 %v1250
        %v1260 = vunpack.c.l.b16 %v1251
        %v1261 = vunpack.c.h.b16 %v1251
        %v1262 = vunpack.c.l.b16 %v1252
        %v1263 = vunpack.c.h.b16 %v1252
        %v1264 = vunpack.c.l.b16 %v1253
        %v1265 = vunpack.c.h.b16 %v1253
        %v1266 = vpack.c.b16 %v1258, %v1258
        %v1267 = vpack.c.b16 %v1259, %v1259
        %v1268 = vpack.c.b16 %v1260, %v1260
        %v1269 = vpack.c.b16 %v1261, %v1261
        %v1270 = vpack.c.b16 %v1262, %v1262
        %v1271 = vpack.c.b16 %v1263, %v1263
        %v1272 = vpack.c.b16 %v1264, %v1264
        %v1273 = vpack.c.b16 %v1265, %v1265
        %1282 = vst [vmem:[%s419] sm:$0xf] %v1266
        %1283 = vst [vmem:[%s419 + $0x4] sm:$0xf] %v1267
        %1284 = vst [vmem:[%s419 + $0x8] sm:$0xf] %v1268
        %1285 = vst [vmem:[%s419 + $0xc] sm:$0xf] %v1269
        %1286 = vst [vmem:[%s419 + $0x10] sm:$0xf] %v1270
        %1287 = vst [vmem:[%s419 + $0x14] sm:$0xf] %v1271
        %1288 = vst [vmem:[%s419 + $0x18] sm:$0xf] %v1272
        %1289 = vst [vmem:[%s419 + $0x1c] sm:$0xf] %v1273
        %v1290 = vmul.f32 %v957, %v1066
        %v1291 = vmul.f32 %v961, %v1067
        %v1292 = vmul.f32 %v967, %v1068
        %v1293 = vmul.f32 %v971, %v1069
        %v1294 = vmul.f32 %v977, %v1070
        %v1295 = vmul.f32 %v981, %v1071
        %v1296 = vmul.f32 %v987, %v1072
        %v1297 = vmul.f32 %v991, %v1073
        %1298 = vrot.lane.b32.xlu0 %v957, 64
        %v1299 = vpop.permute.xlu0 %1298
        %1300 = vrot.lane.b32.xlu0 %v961, 64
        %v1301 = vpop.permute.xlu0 %1300
        %1302 = vrot.lane.b32.xlu0 %v967, 64
        %v1303 = vpop.permute.xlu0 %1302
        %1304 = vrot.lane.b32.xlu0 %v971, 64
        %v1305 = vpop.permute.xlu0 %1304
        %1306 = vrot.lane.b32.xlu0 %v977, 64
        %v1307 = vpop.permute.xlu0 %1306
        %1308 = vrot.lane.b32.xlu0 %v981, 64
        %v1309 = vpop.permute.xlu0 %1308
        %1310 = vrot.lane.b32.xlu0 %v987, 64
        %v1311 = vpop.permute.xlu0 %1310
        %1312 = vrot.lane.b32.xlu0 %v991, 64
        %v1313 = vpop.permute.xlu0 %1312
        %v1314 = vmul.f32 %v1299, %v1074
        %v1315 = vmul.f32 %v1301, %v1075
        %v1316 = vmul.f32 %v1303, %v1076
        %v1317 = vmul.f32 %v1305, %v1077
        %v1318 = vmul.f32 %v1307, %v1078
        %v1319 = vmul.f32 %v1309, %v1079
        %v1320 = vmul.f32 %v1311, %v1080
        %v1321 = vmul.f32 %v1313, %v1081
        %v1322 = vadd.f32 %v1290, %v1314
        %v1323 = vadd.f32 %v1291, %v1315
        %v1324 = vadd.f32 %v1292, %v1316
        %v1325 = vadd.f32 %v1293, %v1317
        %v1326 = vadd.f32 %v1294, %v1318
        %v1327 = vadd.f32 %v1295, %v1319
        %v1328 = vadd.f32 %v1296, %v1320
        %v1329 = vadd.f32 %v1297, %v1321
        %v1330 = vmul.f32 %v1322, 0.088388346
        %v1331 = vmul.f32 %v1323, 0.088388346
        %v1332 = vmul.f32 %v1324, 0.088388346
        %v1333 = vmul.f32 %v1325, 0.088388346
        %v1334 = vmul.f32 %v1326, 0.088388346
        %v1335 = vmul.f32 %v1327, 0.088388346
        %v1336 = vmul.f32 %v1328, 0.088388346
        %v1337 = vmul.f32 %v1329, 0.088388346
        %v1338 = vpack.c.bf16 %v1331, %v1330
        %v1339 = vpack.c.bf16 %v1333, %v1332
        %v1340 = vpack.c.bf16 %v1335, %v1334
        %v1341 = vpack.c.bf16 %v1337, %v1336
        %v1346 = vunpack.c.l.b16 %v1338
        %v1347 = vunpack.c.h.b16 %v1338
        %v1348 = vunpack.c.l.b16 %v1339
        %v1349 = vunpack.c.h.b16 %v1339
        %v1350 = vunpack.c.l.b16 %v1340
        %v1351 = vunpack.c.h.b16 %v1340
        %v1352 = vunpack.c.l.b16 %v1341
        %v1353 = vunpack.c.h.b16 %v1341
        %v1354 = vpack.c.b16 %v1346, %v1346
        %v1355 = vpack.c.b16 %v1347, %v1347
        %v1356 = vpack.c.b16 %v1348, %v1348
        %v1357 = vpack.c.b16 %v1349, %v1349
        %v1358 = vpack.c.b16 %v1350, %v1350
        %v1359 = vpack.c.b16 %v1351, %v1351
        %v1360 = vpack.c.b16 %v1352, %v1352
        %v1361 = vpack.c.b16 %v1353, %v1353
        %s1370 = scalar_lea.vmem %s405, 32 [#allocation9]
        %1371 = vst [vmem:[%s1370] sm:$0xf] %v1354
        %1372 = vst [vmem:[%s1370 + $0x4] sm:$0xf] %v1355
        %1373 = vst [vmem:[%s1370 + $0x8] sm:$0xf] %v1356
        %1374 = vst [vmem:[%s1370 + $0xc] sm:$0xf] %v1357
        %1375 = vst [vmem:[%s1370 + $0x10] sm:$0xf] %v1358
        %1376 = vst [vmem:[%s1370 + $0x14] sm:$0xf] %v1359
        %1377 = vst [vmem:[%s1370 + $0x18] sm:$0xf] %v1360
        %1378 = vst [vmem:[%s1370 + $0x1c] sm:$0xf] %v1361
        %v1379 = vmul.f32 %v1028, %v1066
        %v1380 = vmul.f32 %v1032, %v1067
        %v1381 = vmul.f32 %v1038, %v1068
        %v1382 = vmul.f32 %v1042, %v1069
        %v1383 = vmul.f32 %v1048, %v1070
        %v1384 = vmul.f32 %v1052, %v1071
        %v1385 = vmul.f32 %v1058, %v1072
        %v1386 = vmul.f32 %v1062, %v1073
        %1387 = vrot.lane.b32.xlu0 %v1028, 64
        %v1388 = vpop.permute.xlu0 %1387
        %1389 = vrot.lane.b32.xlu0 %v1032, 64
        %v1390 = vpop.permute.xlu0 %1389
        %1391 = vrot.lane.b32.xlu0 %v1038, 64
        %v1392 = vpop.permute.xlu0 %1391
        %1393 = vrot.lane.b32.xlu0 %v1042, 64
        %v1394 = vpop.permute.xlu0 %1393
        %1395 = vrot.lane.b32.xlu0 %v1048, 64
        %v1396 = vpop.permute.xlu0 %1395
        %1397 = vrot.lane.b32.xlu0 %v1052, 64
        %v1398 = vpop.permute.xlu0 %1397
        %1399 = vrot.lane.b32.xlu0 %v1058, 64
        %v1400 = vpop.permute.xlu0 %1399
        %1401 = vrot.lane.b32.xlu0 %v1062, 64
        %v1402 = vpop.permute.xlu0 %1401
        %v1403 = vmul.f32 %v1388, %v1074
        %v1404 = vmul.f32 %v1390, %v1075
        %v1405 = vmul.f32 %v1392, %v1076
        %v1406 = vmul.f32 %v1394, %v1077
        %v1407 = vmul.f32 %v1396, %v1078
        %v1408 = vmul.f32 %v1398, %v1079
        %v1409 = vmul.f32 %v1400, %v1080
        %v1410 = vmul.f32 %v1402, %v1081
        %v1411 = vadd.f32 %v1379, %v1403
        %v1412 = vadd.f32 %v1380, %v1404
        %v1413 = vadd.f32 %v1381, %v1405
        %v1414 = vadd.f32 %v1382, %v1406
        %v1415 = vadd.f32 %v1383, %v1407
        %v1416 = vadd.f32 %v1384, %v1408
        %v1417 = vadd.f32 %v1385, %v1409
        %v1418 = vadd.f32 %v1386, %v1410
        %v1419 = vpack.c.bf16 %v1412, %v1411
        %v1420 = vpack.c.bf16 %v1414, %v1413
        %v1421 = vpack.c.bf16 %v1416, %v1415
        %v1422 = vpack.c.bf16 %v1418, %v1417
        %v1427 = vunpack.c.l.b16 %v1419
        %v1428 = vunpack.c.h.b16 %v1419
        %v1429 = vunpack.c.l.b16 %v1420
        %v1430 = vunpack.c.h.b16 %v1420
        %v1431 = vunpack.c.l.b16 %v1421
        %v1432 = vunpack.c.h.b16 %v1421
        %v1433 = vunpack.c.l.b16 %v1422
        %v1434 = vunpack.c.h.b16 %v1422
        %v1435 = vpack.c.b16 %v1427, %v1427
        %v1436 = vpack.c.b16 %v1428, %v1428
        %v1437 = vpack.c.b16 %v1429, %v1429
        %v1438 = vpack.c.b16 %v1430, %v1430
        %v1439 = vpack.c.b16 %v1431, %v1431
        %v1440 = vpack.c.b16 %v1432, %v1432
        %v1441 = vpack.c.b16 %v1433, %v1433
        %v1442 = vpack.c.b16 %v1434, %v1434
        %s1451 = scalar_lea.vmem %s412, 32 [#allocation10]
        %1452 = vst [vmem:[%s1451] sm:$0xf] %v1435
        %1453 = vst [vmem:[%s1451 + $0x4] sm:$0xf] %v1436
        %1454 = vst [vmem:[%s1451 + $0x8] sm:$0xf] %v1437
        %1455 = vst [vmem:[%s1451 + $0xc] sm:$0xf] %v1438
        %1456 = vst [vmem:[%s1451 + $0x10] sm:$0xf] %v1439
        %1457 = vst [vmem:[%s1451 + $0x14] sm:$0xf] %v1440
        %1458 = vst [vmem:[%s1451 + $0x18] sm:$0xf] %v1441
        %1459 = vst [vmem:[%s1451 + $0x1c] sm:$0xf] %v1442
        %v1460 = vpack.c.bf16 %v1034, %v1030
        %v1461 = vpack.c.bf16 %v1044, %v1040
        %v1462 = vpack.c.bf16 %v1054, %v1050
        %v1463 = vpack.c.bf16 %v1064, %v1060
        %v1468 = vunpack.c.l.b16 %v1460
        %v1469 = vunpack.c.h.b16 %v1460
        %v1470 = vunpack.c.l.b16 %v1461
        %v1471 = vunpack.c.h.b16 %v1461
        %v1472 = vunpack.c.l.b16 %v1462
        %v1473 = vunpack.c.h.b16 %v1462
        %v1474 = vunpack.c.l.b16 %v1463
        %v1475 = vunpack.c.h.b16 %v1463
        %v1476 = vpack.c.b16 %v1468, %v1468
        %v1477 = vpack.c.b16 %v1469, %v1469
        %v1478 = vpack.c.b16 %v1470, %v1470
        %v1479 = vpack.c.b16 %v1471, %v1471
        %v1480 = vpack.c.b16 %v1472, %v1472
        %v1481 = vpack.c.b16 %v1473, %v1473
        %v1482 = vpack.c.b16 %v1474, %v1474
        %v1483 = vpack.c.b16 %v1475, %v1475
        %s1492 = scalar_lea.vmem %s419, 32 [#allocation12]
        %1493 = vst [vmem:[%s1492] sm:$0xf] %v1476
        %1494 = vst [vmem:[%s1492 + $0x4] sm:$0xf] %v1477
        %1495 = vst [vmem:[%s1492 + $0x8] sm:$0xf] %v1478
        %1496 = vst [vmem:[%s1492 + $0xc] sm:$0xf] %v1479
        %1497 = vst [vmem:[%s1492 + $0x10] sm:$0xf] %v1480
        %1498 = vst [vmem:[%s1492 + $0x14] sm:$0xf] %v1481
        %1499 = vst [vmem:[%s1492 + $0x18] sm:$0xf] %v1482
        %1500 = vst [vmem:[%s1492 + $0x1c] sm:$0xf] %v1483
        %s1501 = sand.u32 %s165, 1
        %s1502 = scalar_lea.sflag [#allocation4], %s1501
        %s1503 = sand.u32 %s165, 1
        %s1504 = smul.addr %s1503, 64
        %s1505 = scalar_lea.vmem [#allocation9], %s1504
        %s1506 = sand.u32 %s28, 1
        %s1507 = scalar_lea.sflag [#allocation11], %s1506
        %s1508 = sand.u32 %s195, 1
        %s1509 = smul.addr %s1508, 64
        %s1510 = scalar_lea.vmem [#allocation10], %s1509
        %s1511 = sand.u32 %s28, 1
        %s1512 = scalar_lea.sflag [#allocation11], %s1511
        %s1513 = sand.u32 %s225, 1
        %s1514 = smul.addr %s1513, 64
        %s1515 = scalar_lea.vmem [#allocation12], %s1514
        // Predicated region
        $region53: #{tpu_custom_call.1} parent=35 // pred_check
          %p1516 = pneg %p175
        $region54: #{tpu_custom_call.1} parent=35 // pred_check_branch
          %1518 = sbr.rel (%p1516) target = $region56
        $region55: #{tpu_custom_call.1} parent=35 // pred_region
          #allocation14 [shape = 'u32[6]{0}', space=smem, size = 0x18, scoped, tag = 'DMA stride descriptor']
          %s1519 = smul.u32 2, %s35
          %s1520 = smul.u32 8, %s34
          %s1522 = ssub.s32 1024, 1024
          %1523 = vsyncadd %s1502, %s1522
          %s1524 = smul.addr %s1519, 16
          %s1525 = sadd.s32 %s1520, %s1524
          %s1526 = smul.addr %s33, 32
          %s1527 = sadd.s32 %s1525, %s1526
          %s1528 = smul.addr %s1527, 64
          %s1529 = scalar_lea.hbm %s4, %s1528
          %s1531 = sshll.u32 1, 14
          %s1532 = sxor.u32 4294967295, %s1531
          %s1535 = sshll.u32 7, 18
          %s1536 = sxor.u32 4294967295, %s1535
          %s1537 = sand.u32 0, %s1536
          %s1539 = sor.u32 %s1537, 0
          %s1540 = sshll.u32 %s1505, 4
          %s1541 = int_to_ptr.vmem [resolvable:$true] %s1540
          %1547 = sst [smem:[#allocation14]] 512
          %s1548 = scalar_lea.smem [#allocation14], 1
          %1549 = sst [smem:[%s1548]] 1024
          %s1550 = scalar_lea.smem [#allocation14], 2
          %1551 = sst [smem:[%s1550]] 8
          %s1552 = scalar_lea.smem [#allocation14], 3
          %1553 = sst [smem:[%s1552]] 64
          %s1554 = scalar_lea.smem [#allocation14], 4
          %1555 = sst [smem:[%s1554]] 64
          %s1556 = scalar_lea.smem [#allocation14], 5
          %1557 = sst [smem:[%s1556]] 4
          %1559 = dma.general %s1541, 1024, %s1529, %s1502, 131072, [#allocation14], %s1539, 0
        $region56: #{tpu_custom_call.1} parent=35 // pred_fallthru
          _
        // Predicated region
        $region57: #{tpu_custom_call.1} parent=35 // pred_check
          %p1560 = pneg %p205
        $region58: #{tpu_custom_call.1} parent=35 // pred_check_branch
          %1562 = sbr.rel (%p1560) target = $region60
        $region59: #{tpu_custom_call.1} parent=35 // pred_region
          #allocation16 [shape = 'u32[6]{0}', space=smem, size = 0x18, scoped, tag = 'DMA stride descriptor']
          %s1563 = smul.u32 2, %s35
          %s1564 = smul.u32 8, %s34
          %s1566 = ssub.s32 1024, 1024
          %1567 = vsyncadd %s1507, %s1566
          %s1568 = smul.addr %s1563, 16
          %s1569 = sadd.s32 %s1564, %s1568
          %s1570 = smul.addr %s33, 32
          %s1571 = sadd.s32 %s1569, %s1570
          %s1572 = smul.addr %s1571, 64
          %s1573 = scalar_lea.hbm %s5, %s1572
          %s1575 = sshll.u32 1, 14
          %s1576 = sxor.u32 4294967295, %s1575
          %s1579 = sshll.u32 7, 18
          %s1580 = sxor.u32 4294967295, %s1579
          %s1581 = sand.u32 0, %s1580
          %s1583 = sor.u32 %s1581, 0
          %s1584 = sshll.u32 %s1510, 4
          %s1585 = int_to_ptr.vmem [resolvable:$true] %s1584
          %1591 = sst [smem:[#allocation16]] 512
          %s1592 = scalar_lea.smem [#allocation16], 1
          %1593 = sst [smem:[%s1592]] 1024
          %s1594 = scalar_lea.smem [#allocation16], 2
          %1595 = sst [smem:[%s1594]] 8
          %s1596 = scalar_lea.smem [#allocation16], 3
          %1597 = sst [smem:[%s1596]] 64
          %s1598 = scalar_lea.smem [#allocation16], 4
          %1599 = sst [smem:[%s1598]] 64
          %s1600 = scalar_lea.smem [#allocation16], 5
          %1601 = sst [smem:[%s1600]] 4
          %1603 = dma.general %s1585, 1024, %s1573, %s1507, 131072, [#allocation16], %s1583, 0
        $region60: #{tpu_custom_call.1} parent=35 // pred_fallthru
          _
        // Predicated region
        $region61: #{tpu_custom_call.1} parent=35 // pred_check
          %p1604 = pneg %p235
        $region62: #{tpu_custom_call.1} parent=35 // pred_check_branch
          %1606 = sbr.rel (%p1604) target = $region64
        $region63: #{tpu_custom_call.1} parent=35 // pred_region
          #allocation18 [shape = 'u32[6]{0}', space=smem, size = 0x18, scoped, tag = 'DMA stride descriptor']
          %s1607 = smul.u32 2, %s35
          %s1608 = smul.u32 8, %s34
          %s1610 = ssub.s32 1024, 1024
          %1611 = vsyncadd %s1512, %s1610
          %s1612 = smul.addr %s1607, 16
          %s1613 = sadd.s32 %s1608, %s1612
          %s1614 = smul.addr %s33, 32
          %s1615 = sadd.s32 %s1613, %s1614
          %s1616 = smul.addr %s1615, 64
          %s1617 = scalar_lea.hbm %s6, %s1616
          %s1619 = sshll.u32 1, 14
          %s1620 = sxor.u32 4294967295, %s1619
          %s1623 = sshll.u32 7, 18
          %s1624 = sxor.u32 4294967295, %s1623
          %s1625 = sand.u32 0, %s1624
          %s1627 = sor.u32 %s1625, 0
          %s1628 = sshll.u32 %s1515, 4
          %s1629 = int_to_ptr.vmem [resolvable:$true] %s1628
          %1635 = sst [smem:[#allocation18]] 512
          %s1636 = scalar_lea.smem [#allocation18], 1
          %1637 = sst [smem:[%s1636]] 1024
          %s1638 = scalar_lea.smem [#allocation18], 2
          %1639 = sst [smem:[%s1638]] 8
          %s1640 = scalar_lea.smem [#allocation18], 3
          %1641 = sst [smem:[%s1640]] 64
          %s1642 = scalar_lea.smem [#allocation18], 4
          %1643 = sst [smem:[%s1642]] 64
          %s1644 = scalar_lea.smem [#allocation18], 5
          %1645 = sst [smem:[%s1644]] 4
          %1647 = dma.general %s1629, 1024, %s1617, %s1512, 131072, [#allocation18], %s1627, 0
        $region64: #{tpu_custom_call.1} parent=35 // pred_fallthru
          _
      $region36: #{tpu_custom_call.1} parent=5 // pred_fallthru
        _
      %p1648 = scmp.le.s32.totalorder 2, %s23
      // Predicated region
      $region65: #{tpu_custom_call.1} parent=5 // pred_check
        %p1649 = pneg %p1648
      $region66: #{tpu_custom_call.1} parent=5 // pred_check_branch
        %1651 = sbr.rel (%p1649) target = $region68
      $region67: #{tpu_custom_call.1} parent=5 // pred_region
        %s1652 = ssub.s32 %s23, 2
        // Predicated region
        $region69: #{tpu_custom_call.1} parent=67 // pred_check
          %p1653 = pneg %p181
        $region70: #{tpu_custom_call.1} parent=67 // pred_check_branch
          %1655 = sbr.rel (%p1653) target = $region72
        $region71: #{tpu_custom_call.1} parent=67 // pred_region
          %s1656 = sand.u32 %s166, 1
          %s1657 = scalar_lea.sflag [#allocation4], %s1656
          %s1658 = sand.u32 %s166, 1
          %s1659 = smul.addr %s1658, 64
          %s1660 = scalar_lea.vmem [#allocation9], %s1659
          %1661 = dma.done %s1657, 1024
        $region72: #{tpu_custom_call.1} parent=67 // pred_fallthru
          _
        // Predicated region
        $region73: #{tpu_custom_call.1} parent=67 // pred_check
          %p1662 = pneg %p211
        $region74: #{tpu_custom_call.1} parent=67 // pred_check_branch
          %1664 = sbr.rel (%p1662) target = $region76
        $region75: #{tpu_custom_call.1} parent=67 // pred_region
          %s1665 = sand.u32 %s29, 1
          %s1666 = scalar_lea.sflag [#allocation11], %s1665
          %s1667 = sand.u32 %s196, 1
          %s1668 = smul.addr %s1667, 64
          %s1669 = scalar_lea.vmem [#allocation10], %s1668
          %1670 = dma.done %s1666, 1024
        $region76: #{tpu_custom_call.1} parent=67 // pred_fallthru
          _
        // Predicated region
        $region77: #{tpu_custom_call.1} parent=67 // pred_check
          %p1671 = pneg %p241
        $region78: #{tpu_custom_call.1} parent=67 // pred_check_branch
          %1673 = sbr.rel (%p1671) target = $region80
        $region79: #{tpu_custom_call.1} parent=67 // pred_region
          %s1674 = sand.u32 %s29, 1
          %s1675 = scalar_lea.sflag [#allocation11], %s1674
          %s1676 = sand.u32 %s226, 1
          %s1677 = smul.addr %s1676, 64
          %s1678 = scalar_lea.vmem [#allocation12], %s1677
          %1679 = dma.done %s1675, 1024
        $region80: #{tpu_custom_call.1} parent=67 // pred_fallthru
          _
      $region68: #{tpu_custom_call.1} parent=5 // pred_fallthru
        _
    $region6: #{tpu_custom_call.1} parent=1 // loop_footer
      %s27 = sadd.s32 1, %s23
    $region7: #{tpu_custom_call.1} parent=1 // loop_footer_branch
      %22 = sbr.rel target = $region3
    $region8: #{tpu_custom_call.1} parent=1 // loop_exit
      _
    %1680 = vsyncpa [#allocation3], 1
    %s1681 = scalar_lea.sflag [#allocation3], 1
    %1682 = vsyncpa %s1681, 1
    %1683 = vsyncpa [#allocation6], 1
    %1684 = vsyncpa [#allocation4], 1
    %s1685 = scalar_lea.sflag [#allocation4], 1
    %1686 = vsyncpa %s1685, 1
    %1687 = vsyncpa [#allocation11], 1
    %s1688 = scalar_lea.sflag [#allocation11], 1
    %1689 = vsyncpa %s1688, 1

</llo_original>
